<compile_context>
chip_gen: v5e
topology: v5e:2x2
jax: 0.10.0
libtpu: 0.0.40
codegen_flags: <defaults>
</compile_context>

<pallas_src>
import functools

import jax
import jax.numpy as jnp
from jax import lax
from jax.experimental import pallas as pl
from jax.experimental.pallas import tpu as pltpu


def _lstm_recurrent_kernel(p_ref, whh_ref, bias_ref,          # inputs
                           y_ref, hn_ref, cn_ref,              # outputs
                           h_sc, c_sc,                          # scratch (carried state)
                           *, d_pad, t_chunk, t_actual, n_chunks, n_sub, unroll):
    chunk = pl.program_id(1)
    Dp = d_pad
    bt = h_sc.shape[0]
    sub = bt // n_sub

    # reset(): zero initial hidden/cell state at the first time-chunk of each batch tile.
    @pl.when(chunk == 0)
    def _():
        h_sc[...] = jnp.zeros_like(h_sc)
        c_sc[...] = jnp.zeros_like(c_sc)

    whh = whh_ref[...]        # (Dp, 4*Dp) bf16, resident across the whole grid
    bias = bias_ref[...]      # (1, 4*Dp)  f32, resident

    need_mask = (t_actual % t_chunk) != 0

    def step(t, carry):
        hs, cs = carry                                  # tuples of (sub, Dp) f32
        p_t = p_ref[t]                                  # (bt, 4*Dp) bf16
        # Issue the independent sub-tile matmuls first: sub-tile k+1's vmatmul
        # can co-issue with sub-tile k's sigmoid/tanh tail (MXU and EUP occupy
        # different bundle slots) -> hides latency of the dependent chain.
        gates = [
            jnp.dot(hs[k].astype(jnp.bfloat16), whh,
                    preferred_element_type=jnp.float32)
            + p_t[k * sub:(k + 1) * sub].astype(jnp.float32)
            + bias
            for k in range(n_sub)
        ]
        if need_mask:
            # Time axis was padded to a multiple of t_chunk: padded steps must
            # not advance the carry (their y rows are discarded by the wrapper).
            valid = (chunk * t_chunk + t) < t_actual
        new_hs, new_cs = [], []
        for k in range(n_sub):
            g = gates[k]
            # PyTorch gate order [i, f, g, o]; each block is Dp lanes -> lane-aligned slices.
            i_g = jax.nn.sigmoid(g[:, 0 * Dp:1 * Dp])
            f_g = jax.nn.sigmoid(g[:, 1 * Dp:2 * Dp])
            g_g = jnp.tanh(g[:, 2 * Dp:3 * Dp])
            o_g = jax.nn.sigmoid(g[:, 3 * Dp:4 * Dp])
            c_new = f_g * cs[k] + i_g * g_g
            h_new = o_g * jnp.tanh(c_new)
            if need_mask:
                h_new = jnp.where(valid, h_new, hs[k])
                c_new = jnp.where(valid, c_new, cs[k])
            y_ref[t, k * sub:(k + 1) * sub] = h_new.astype(y_ref.dtype)
            new_hs.append(h_new)
            new_cs.append(c_new)
        return tuple(new_hs), tuple(new_cs)

    h0 = h_sc[...]
    c0 = c_sc[...]
    hs0 = tuple(h0[k * sub:(k + 1) * sub] for k in range(n_sub))
    cs0 = tuple(c0[k * sub:(k + 1) * sub] for k in range(n_sub))
    hs_f, cs_f = lax.fori_loop(0, t_chunk, step, (hs0, cs0), unroll=unroll)
    for k in range(n_sub):
        h_sc[k * sub:(k + 1) * sub] = hs_f[k]
        c_sc[k * sub:(k + 1) * sub] = cs_f[k]

    # Only the final time chunk writes the (resident) h_n / c_n blocks.
    # NOTE: correctness relies on time being the innermost grid axis (block revisiting).
    @pl.when(chunk == n_chunks - 1)
    def _():
        hn_ref[...] = h_sc[...].astype(hn_ref.dtype)
        cn_ref[...] = c_sc[...].astype(cn_ref.dtype)


def _round_up(n, m):
    return ((n + m - 1) // m) * m


def _vmem_capacity_bytes():
    try:
        info = pltpu.get_tpu_info()
        cap = getattr(info, "vmem_capacity_bytes", None)
        if cap:
            return int(cap)
    except Exception:
        pass
    return 64 * 1024 * 1024     # conservative fallback (v7x physical VMEM per TC)


def _pad_gate_cols(w, d, d_pad):
    """(R, 4*d) -> (R, 4*d_pad): pad every gate's column block to d_pad lanes."""
    if d_pad == d:
        return w
    r = w.shape[0]
    w4 = w.reshape(r, 4, d)
    w4 = jnp.pad(w4, ((0, 0), (0, 0), (0, d_pad - d)))
    return w4.reshape(r, 4 * d_pad)


@functools.partial(jax.jit, static_argnames=("t_chunk", "batch_tiles"))
def lstm_layer_forward(x_btd, w_ih, w_hh, b_ih, b_hh, *, t_chunk=None, batch_tiles=1):
    """x_btd: (B, T, D) batch_first like PyTorch.
    w_ih, w_hh: (4D, D); b_ih, b_hh: (4D,)  (nn.LSTM layout, gate order i,f,g,o).
    Returns (y (B, T, D), (h_n (1, B, D), c_n (1, B, D))).
    batch_tiles: pass 2 on v7x (two TensorCores/chip); keep 1 on v5e/v6e where the
    'parallel' grid axis is a serial loop on a single TensorCore.
    """
    B, T, D = x_btd.shape
    dtype = x_btd.dtype
    Dp = _round_up(D, 128)              # lane-align every gate block

    # ---- Hoisted input projection: parallel over B*T rows, off the serial path.
    # bf16 MXU operands (no Precision.HIGHEST / f32 upcast); bias added in-kernel in f32.
    wih_t = _pad_gate_cols(jnp.transpose(w_ih), D, Dp).astype(jnp.bfloat16)      # (D, 4*Dp)
    # einsum writes (T, B, 4Dp) directly — no separately materialized transpose of x.
    p = jnp.einsum("btd,df->tbf", x_btd.astype(jnp.bfloat16), wih_t,
                   preferred_element_type=jnp.bfloat16)                          # (T, B, 4*Dp) bf16

    # Recurrent weight: VMEM-resident bf16, gate blocks lane-aligned, rows zero-padded D->Dp.
    whh_t = _pad_gate_cols(jnp.transpose(w_hh), D, Dp)                           # (D, 4*Dp)
    whh_t = jnp.pad(whh_t, ((0, Dp - D), (0, 0))).astype(jnp.bfloat16)           # (Dp, 4*Dp)

    bias = _pad_gate_cols((b_ih + b_hh).astype(jnp.float32)[None, :], D, Dp)     # (1, 4*Dp) f32

    # ---- Batch tiling: only for chips with 2 TensorCores (v7x megacore) ----
    bt = B
    if batch_tiles > 1 and B % (8 * batch_tiles) == 0:
        bt = B // batch_tiles
    n_b_tiles = B // bt

    # ---- Time-chunk length from a per-generation VMEM budget ----
    out_isize = jnp.dtype(dtype).itemsize
    vmem_cap = _vmem_capacity_bytes()
    fixed = (2 * Dp * 4 * Dp * 2                   # W_hh^T bf16, 2 pipeline buffers
             + 2 * 8 * 4 * Dp * 4                  # bias block (padded to 8 sublanes), 2 buffers
             + 2 * bt * Dp * 4                     # h/c carry scratch (f32)
             + 2 * 2 * bt * Dp * out_isize)        # h_n / c_n output blocks
    per_t = 2 * (bt * 4 * Dp * 2 + bt * Dp * out_isize)   # double-buffered P + y per timestep
    budget = int(0.75 * vmem_cap)                  # headroom for compiler-internal scratch
    tc_cap = max(1, (budget - fixed) // per_t)
    if t_chunk is None:
        tc = max(1, min(T, 64, int(tc_cap)))
    else:
        tc = max(1, min(int(t_chunk), T))

    n_chunks = pl.cdiv(T, tc)
    t_pad = n_chunks * tc
    if t_pad != T:
        p = jnp.pad(p, ((0, t_pad - T), (0, 0), (0, 0)))

    # In-kernel interleave of two independent batch sub-tiles (latency hiding on the
    # serial MXU->EUP chain); only when the sub-tiles stay sublane-aligned.
    n_sub = 2 if bt % 16 == 0 else 1
    # Bounded unroll: full unroll only when the per-step live set is small (few vregs).
    gate_bytes = bt * 4 * Dp * 4
    unroll = tc if gate_bytes <= 64 * 1024 else min(8, tc)

    kernel = functools.partial(_lstm_recurrent_kernel, d_pad=Dp, t_chunk=tc,
                               t_actual=T, n_chunks=n_chunks, n_sub=n_sub,
                               unroll=unroll)

    grid_spec = pltpu.PrefetchScalarGridSpec(
        num_scalar_prefetch=0,
        grid=(n_b_tiles, n_chunks),
        in_specs=[
            pl.BlockSpec((tc, bt, 4 * Dp), lambda b, c: (c, b, 0)),    # P time-chunk (bf16)
            # TODO(synk): on v7x with large D, pipeline_mode=pl.Buffered(1) here (or a
            # one-time manual DMA) would drop the redundant second buffer of W_hh^T.
            pl.BlockSpec((Dp, 4 * Dp), lambda b, c: (0, 0)),           # W_hh^T (resident)
            pl.BlockSpec((1, 4 * Dp), lambda b, c: (0, 0)),            # bias (resident, f32)
        ],
        out_specs=[
            pl.BlockSpec((tc, bt, Dp), lambda b, c: (c, b, 0)),        # y time-chunk
            pl.BlockSpec((bt, Dp), lambda b, c: (b, 0)),               # h_n
            pl.BlockSpec((bt, Dp), lambda b, c: (b, 0)),               # c_n
        ],
        scratch_shapes=[
            pltpu.VMEM((bt, Dp), jnp.float32),   # h carry
            pltpu.VMEM((bt, Dp), jnp.float32),   # c carry
        ],
    )

    y_pad, h_n, c_n = pl.pallas_call(
        kernel,
        out_shape=(
            jax.ShapeDtypeStruct((t_pad, B, Dp), dtype),
            jax.ShapeDtypeStruct((B, Dp), dtype),
            jax.ShapeDtypeStruct((B, Dp), dtype),
        ),
        grid_spec=grid_spec,
        compiler_params=pltpu.CompilerParams(
            # batch tiles are independent (megacore-shardable on v7x); time is serial.
            dimension_semantics=("parallel", "arbitrary"),
            vmem_limit_bytes=int(0.9 * vmem_cap),
        ),
    )(p, whh_t, bias)

    y_btd = jnp.transpose(y_pad[:T, :, :D], (1, 0, 2))
    # TODO(synk): nn.Dropout(0.1) is stochastic and only active in training mode;
    # forward here matches eval-mode semantics (identity).
    return y_btd, (h_n[None, :, :D], c_n[None, :, :D])


def _reference_lstm(x_btd, w_ih, w_hh, b_ih, b_hh):
    """Pure-JAX f32 reference (lax.scan) matching torch.nn.LSTM with zero init state."""
    B, T, D = x_btd.shape
    x_tbd = jnp.transpose(x_btd, (1, 0, 2)).astype(jnp.float32)
    wih_t = jnp.transpose(w_ih).astype(jnp.float32)
    whh_t = jnp.transpose(w_hh).astype(jnp.float32)
    b = (b_ih + b_hh).astype(jnp.float32)

    def step(carry, x_t):
        h, c = carry
        gates = x_t @ wih_t + h @ whh_t + b
        i = jax.nn.sigmoid(gates[:, 0 * D:1 * D])
        f = jax.nn.sigmoid(gates[:, 1 * D:2 * D])
        g = jnp.tanh(gates[:, 2 * D:3 * D])
        o = jax.nn.sigmoid(gates[:, 3 * D:4 * D])
        c_new = f * c + i * g
        h_new = o * jnp.tanh(c_new)
        return (h_new, c_new), h_new

    h0 = jnp.zeros((B, D), jnp.float32)
    c0 = jnp.zeros((B, D), jnp.float32)
    (h_n, c_n), ys = jax.lax.scan(step, (h0, c0), x_tbd)
    return jnp.transpose(ys, (1, 0, 2)), h_n[None], c_n[None]


if __name__ == "__main__":
    # Small shapes consistent with the module: batch_first LSTM input (B, T, D).
    B, T, D = 4, 8, 32

    key = jax.random.PRNGKey(0)
    kx, k1, k2, k3, k4 = jax.random.split(key, 5)

    x = jax.random.normal(kx, (B, T, D), dtype=jnp.float32)

    # Deterministic parameter init, same scheme as torch.nn.LSTM: U(-1/sqrt(D), 1/sqrt(D)).
    bound = 1.0 / jnp.sqrt(jnp.float32(D))
    w_ih = jax.random.uniform(k1, (4 * D, D), jnp.float32, -bound, bound)
    w_hh = jax.random.uniform(k2, (4 * D, D), jnp.float32, -bound, bound)
    b_ih = jax.random.uniform(k3, (4 * D,), jnp.float32, -bound, bound)
    b_hh = jax.random.uniform(k4, (4 * D,), jnp.float32, -bound, bound)

    y, (h_n, c_n) = lstm_layer_forward(x, w_ih, w_hh, b_ih, b_hh)
    jax.block_until_ready((y, h_n, c_n))

    y_ref, h_ref, c_ref = _reference_lstm(x, w_ih, w_hh, b_ih, b_hh)
    # bf16 MXU operands (f32 accumulate) for both the hoisted projection and the
    # recurrence: compare with a mixed-precision tolerance.
    assert jnp.allclose(y, y_ref, atol=2e-2, rtol=2e-2), float(jnp.max(jnp.abs(y - y_ref)))
    assert jnp.allclose(h_n, h_ref, atol=2e-2, rtol=2e-2)
    assert jnp.allclose(c_n, c_ref, atol=2e-2, rtol=2e-2)

    print("KERNEL_OK")
</pallas_src>

<mosaic_0001>
module attributes {stable_mosaic.version = 11 : i64} {
  func.func @_lstm_recurrent_kernel(%arg0: i32, %arg1: i32, %arg2: memref<8x4x512xbf16, #tpu.memory_space<vmem>>, %arg3: memref<128x512xbf16, #tpu.memory_space<vmem>>, %arg4: memref<1x512xf32, #tpu.memory_space<vmem>>, %arg5: memref<8x4x128xf32, #tpu.memory_space<vmem>>, %arg6: memref<4x128xf32, #tpu.memory_space<vmem>>, %arg7: memref<4x128xf32, #tpu.memory_space<vmem>>, %arg8: memref<4x128xf32, #tpu.memory_space<vmem>>, %arg9: memref<4x128xf32, #tpu.memory_space<vmem>>) attributes {dimension_semantics = [#tpu.dimension_semantics<parallel>, #tpu.dimension_semantics<arbitrary>], iteration_bounds = array<i64: 1, 1>, scalar_prefetch = 0 : i64, scratch_operands = 2 : i64, tpu.core_type = #tpu.core_type<tc>, window_params = [{transform_indices = @transform_0, window_bounds = array<i64: 8, 4, 512>}, {pipeline_mode = #tpu.pipeline_mode<synchronous>, transform_indices = @transform_1, window_bounds = array<i64: 128, 512>}, {pipeline_mode = #tpu.pipeline_mode<synchronous>, transform_indices = @transform_2, window_bounds = array<i64: 1, 512>}, {transform_indices = @transform_3, window_bounds = array<i64: 8, 4, 128>}, {transform_indices = @transform_4, window_bounds = array<i64: 4, 128>}, {transform_indices = @transform_5, window_bounds = array<i64: 4, 128>}]} {
    %c0_i32 = arith.constant 0 : i32
    %0 = arith.cmpi eq, %arg1, %c0_i32 : i32
    %1 = arith.extui %0 : i1 to i32
    %c0_i32_0 = arith.constant 0 : i32
    %2 = arith.cmpi ne, %1, %c0_i32_0 : i32
    scf.if %2 {
      %cst_78 = arith.constant 0.000000e+00 : f32
      %316 = vector.broadcast %cst_78 : f32 to vector<4x128xf32>
      %c0_79 = arith.constant 0 : index
      %c0_80 = arith.constant 0 : index
      %317 = vector.load %arg8[%c0_79, %c0_80] : memref<4x128xf32, #tpu.memory_space<vmem>>, vector<4x128xf32>
      tpu.vector_store %arg8[%c0_79, %c0_80], %316 {strides = array<i32>} : memref<4x128xf32, #tpu.memory_space<vmem>>, vector<4x128xf32>,
      %cst_81 = arith.constant 0.000000e+00 : f32
      %318 = vector.broadcast %cst_81 : f32 to vector<4x128xf32>
      %c0_82 = arith.constant 0 : index
      %c0_83 = arith.constant 0 : index
      %319 = vector.load %arg9[%c0_82, %c0_83] : memref<4x128xf32, #tpu.memory_space<vmem>>, vector<4x128xf32>
      tpu.vector_store %arg9[%c0_82, %c0_83], %318 {strides = array<i32>} : memref<4x128xf32, #tpu.memory_space<vmem>>, vector<4x128xf32>,
    } else {
    }
    %c0 = arith.constant 0 : index
    %c0_1 = arith.constant 0 : index
    %3 = vector.load %arg3[%c0, %c0_1] : memref<128x512xbf16, #tpu.memory_space<vmem>>, vector<128x512xbf16>
    %c0_2 = arith.constant 0 : index
    %c0_3 = arith.constant 0 : index
    %4 = vector.load %arg4[%c0_2, %c0_3] : memref<1x512xf32, #tpu.memory_space<vmem>>, vector<1x512xf32>
    %c0_4 = arith.constant 0 : index
    %c0_5 = arith.constant 0 : index
    %5 = vector.load %arg8[%c0_4, %c0_5] : memref<4x128xf32, #tpu.memory_space<vmem>>, vector<4x128xf32>
    %c0_6 = arith.constant 0 : index
    %c0_7 = arith.constant 0 : index
    %6 = vector.load %arg9[%c0_6, %c0_7] : memref<4x128xf32, #tpu.memory_space<vmem>>, vector<4x128xf32>
    %c0_i32_8 = arith.constant 0 : i32
    %7 = arith.index_cast %c0_i32_8 : i32 to index
    %c0_9 = arith.constant 0 : index
    %c0_10 = arith.constant 0 : index
    %8 = vector.load %arg2[%7, %c0_9, %c0_10] : memref<8x4x512xbf16, #tpu.memory_space<vmem>>, vector<1x4x512xbf16>
    %9 = vector.shape_cast %8 : vector<1x4x512xbf16> to vector<4x512xbf16>
    %10 = arith.truncf %5 : vector<4x128xf32> to vector<4x128xbf16>
    %cst = arith.constant dense<0.000000e+00> : vector<4x512xf32>
    %11 = tpu.matmul %10, %3, %cst {dimension_numbers = #tpu.dot_dimension_numbers<[1], [0], [0], [1], [0, 0, 1, 1], [], []>} : vector<4x128xbf16>, vector<128x512xbf16>, vector<4x512xf32> -> vector<4x512xf32>
    %12 = arith.extf %9 : vector<4x512xbf16> to vector<4x512xf32>
    %13 = arith.addf %11, %12 : vector<4x512xf32>
    %14 = vector.broadcast %4 : vector<1x512xf32> to vector<4x512xf32>
    %15 = arith.addf %13, %14 : vector<4x512xf32>
    %16 = vector.extract_strided_slice %15 {offsets = [0, 0], sizes = [4, 128], strides = [1, 1]} : vector<4x512xf32> to vector<4x128xf32>
    %17 = arith.negf %16 : vector<4x128xf32>
    %18 = math.exp %17 : vector<4x128xf32>
    %cst_11 = arith.constant 1.000000e+00 : f32
    %19 = vector.broadcast %cst_11 : f32 to vector<4x128xf32>
    %20 = arith.addf %19, %18 : vector<4x128xf32>
    %21 = arith.divf %19, %20 : vector<4x128xf32>
    %22 = vector.extract_strided_slice %15 {offsets = [0, 128], sizes = [4, 128], strides = [1, 1]} : vector<4x512xf32> to vector<4x128xf32>
    %23 = arith.negf %22 : vector<4x128xf32>
    %24 = math.exp %23 : vector<4x128xf32>
    %cst_12 = arith.constant 1.000000e+00 : f32
    %25 = vector.broadcast %cst_12 : f32 to vector<4x128xf32>
    %26 = arith.addf %25, %24 : vector<4x128xf32>
    %27 = arith.divf %25, %26 : vector<4x128xf32>
    %28 = vector.extract_strided_slice %15 {offsets = [0, 256], sizes = [4, 128], strides = [1, 1]} : vector<4x512xf32> to vector<4x128xf32>
    %29 = math.tanh %28 : vector<4x128xf32>
    %30 = vector.extract_strided_slice %15 {offsets = [0, 384], sizes = [4, 128], strides = [1, 1]} : vector<4x512xf32> to vector<4x128xf32>
    %31 = arith.negf %30 : vector<4x128xf32>
    %32 = math.exp %31 : vector<4x128xf32>
    %cst_13 = arith.constant 1.000000e+00 : f32
    %33 = vector.broadcast %cst_13 : f32 to vector<4x128xf32>
    %34 = arith.addf %33, %32 : vector<4x128xf32>
    %35 = arith.divf %33, %34 : vector<4x128xf32>
    %36 = arith.mulf %27, %6 : vector<4x128xf32>
    %37 = arith.mulf %21, %29 : vector<4x128xf32>
    %38 = arith.addf %36, %37 : vector<4x128xf32>
    %39 = math.tanh %38 : vector<4x128xf32>
    %40 = arith.mulf %35, %39 : vector<4x128xf32>
    %41 = arith.index_cast %c0_i32_8 : i32 to index
    %c0_14 = arith.constant 0 : index
    %c0_15 = arith.constant 0 : index
    %42 = vector.load %arg5[%41, %c0_14, %c0_15] : memref<8x4x128xf32, #tpu.memory_space<vmem>>, vector<1x4x128xf32>
    %43 = vector.shape_cast %42 : vector<1x4x128xf32> to vector<4x128xf32>
    %44 = vector.shape_cast %40 : vector<4x128xf32> to vector<1x4x128xf32>
    tpu.vector_store %arg5[%41, %c0_14, %c0_15], %44 {strides = array<i32>} : memref<8x4x128xf32, #tpu.memory_space<vmem>>, vector<1x4x128xf32>,
    %c1_i32 = arith.constant 1 : i32
    %45 = arith.index_cast %c1_i32 : i32 to index
    %c0_16 = arith.constant 0 : index
    %c0_17 = arith.constant 0 : index
    %46 = vector.load %arg2[%45, %c0_16, %c0_17] : memref<8x4x512xbf16, #tpu.memory_space<vmem>>, vector<1x4x512xbf16>
    %47 = vector.shape_cast %46 : vector<1x4x512xbf16> to vector<4x512xbf16>
    %48 = arith.truncf %40 : vector<4x128xf32> to vector<4x128xbf16>
    %cst_18 = arith.constant dense<0.000000e+00> : vector<4x512xf32>
    %49 = tpu.matmul %48, %3, %cst_18 {dimension_numbers = #tpu.dot_dimension_numbers<[1], [0], [0], [1], [0, 0, 1, 1], [], []>} : vector<4x128xbf16>, vector<128x512xbf16>, vector<4x512xf32> -> vector<4x512xf32>
    %50 = arith.extf %47 : vector<4x512xbf16> to vector<4x512xf32>
    %51 = arith.addf %49, %50 : vector<4x512xf32>
    %52 = vector.broadcast %4 : vector<1x512xf32> to vector<4x512xf32>
    %53 = arith.addf %51, %52 : vector<4x512xf32>
    %54 = vector.extract_strided_slice %53 {offsets = [0, 0], sizes = [4, 128], strides = [1, 1]} : vector<4x512xf32> to vector<4x128xf32>
    %55 = arith.negf %54 : vector<4x128xf32>
    %56 = math.exp %55 : vector<4x128xf32>
    %cst_19 = arith.constant 1.000000e+00 : f32
    %57 = vector.broadcast %cst_19 : f32 to vector<4x128xf32>
    %58 = arith.addf %57, %56 : vector<4x128xf32>
    %59 = arith.divf %57, %58 : vector<4x128xf32>
    %60 = vector.extract_strided_slice %53 {offsets = [0, 128], sizes = [4, 128], strides = [1, 1]} : vector<4x512xf32> to vector<4x128xf32>
    %61 = arith.negf %60 : vector<4x128xf32>
    %62 = math.exp %61 : vector<4x128xf32>
    %cst_20 = arith.constant 1.000000e+00 : f32
    %63 = vector.broadcast %cst_20 : f32 to vector<4x128xf32>
    %64 = arith.addf %63, %62 : vector<4x128xf32>
    %65 = arith.divf %63, %64 : vector<4x128xf32>
    %66 = vector.extract_strided_slice %53 {offsets = [0, 256], sizes = [4, 128], strides = [1, 1]} : vector<4x512xf32> to vector<4x128xf32>
    %67 = math.tanh %66 : vector<4x128xf32>
    %68 = vector.extract_strided_slice %53 {offsets = [0, 384], sizes = [4, 128], strides = [1, 1]} : vector<4x512xf32> to vector<4x128xf32>
    %69 = arith.negf %68 : vector<4x128xf32>
    %70 = math.exp %69 : vector<4x128xf32>
    %cst_21 = arith.constant 1.000000e+00 : f32
    %71 = vector.broadcast %cst_21 : f32 to vector<4x128xf32>
    %72 = arith.addf %71, %70 : vector<4x128xf32>
    %73 = arith.divf %71, %72 : vector<4x128xf32>
    %74 = arith.mulf %65, %38 : vector<4x128xf32>
    %75 = arith.mulf %59, %67 : vector<4x128xf32>
    %76 = arith.addf %74, %75 : vector<4x128xf32>
    %77 = math.tanh %76 : vector<4x128xf32>
    %78 = arith.mulf %73, %77 : vector<4x128xf32>
    %79 = arith.index_cast %c1_i32 : i32 to index
    %c0_22 = arith.constant 0 : index
    %c0_23 = arith.constant 0 : index
    %80 = vector.load %arg5[%79, %c0_22, %c0_23] : memref<8x4x128xf32, #tpu.memory_space<vmem>>, vector<1x4x128xf32>
    %81 = vector.shape_cast %80 : vector<1x4x128xf32> to vector<4x128xf32>
    %82 = vector.shape_cast %78 : vector<4x128xf32> to vector<1x4x128xf32>
    tpu.vector_store %arg5[%79, %c0_22, %c0_23], %82 {strides = array<i32>} : memref<8x4x128xf32, #tpu.memory_space<vmem>>, vector<1x4x128xf32>,
    %c2_i32 = arith.constant 2 : i32
    %83 = arith.index_cast %c2_i32 : i32 to index
    %c0_24 = arith.constant 0 : index
    %c0_25 = arith.constant 0 : index
    %84 = vector.load %arg2[%83, %c0_24, %c0_25] : memref<8x4x512xbf16, #tpu.memory_space<vmem>>, vector<1x4x512xbf16>
    %85 = vector.shape_cast %84 : vector<1x4x512xbf16> to vector<4x512xbf16>
    %86 = arith.truncf %78 : vector<4x128xf32> to vector<4x128xbf16>
    %cst_26 = arith.constant dense<0.000000e+00> : vector<4x512xf32>
    %87 = tpu.matmul %86, %3, %cst_26 {dimension_numbers = #tpu.dot_dimension_numbers<[1], [0], [0], [1], [0, 0, 1, 1], [], []>} : vector<4x128xbf16>, vector<128x512xbf16>, vector<4x512xf32> -> vector<4x512xf32>
    %88 = arith.extf %85 : vector<4x512xbf16> to vector<4x512xf32>
    %89 = arith.addf %87, %88 : vector<4x512xf32>
    %90 = vector.broadcast %4 : vector<1x512xf32> to vector<4x512xf32>
    %91 = arith.addf %89, %90 : vector<4x512xf32>
    %92 = vector.extract_strided_slice %91 {offsets = [0, 0], sizes = [4, 128], strides = [1, 1]} : vector<4x512xf32> to vector<4x128xf32>
    %93 = arith.negf %92 : vector<4x128xf32>
    %94 = math.exp %93 : vector<4x128xf32>
    %cst_27 = arith.constant 1.000000e+00 : f32
    %95 = vector.broadcast %cst_27 : f32 to vector<4x128xf32>
    %96 = arith.addf %95, %94 : vector<4x128xf32>
    %97 = arith.divf %95, %96 : vector<4x128xf32>
    %98 = vector.extract_strided_slice %91 {offsets = [0, 128], sizes = [4, 128], strides = [1, 1]} : vector<4x512xf32> to vector<4x128xf32>
    %99 = arith.negf %98 : vector<4x128xf32>
    %100 = math.exp %99 : vector<4x128xf32>
    %cst_28 = arith.constant 1.000000e+00 : f32
    %101 = vector.broadcast %cst_28 : f32 to vector<4x128xf32>
    %102 = arith.addf %101, %100 : vector<4x128xf32>
    %103 = arith.divf %101, %102 : vector<4x128xf32>
    %104 = vector.extract_strided_slice %91 {offsets = [0, 256], sizes = [4, 128], strides = [1, 1]} : vector<4x512xf32> to vector<4x128xf32>
    %105 = math.tanh %104 : vector<4x128xf32>
    %106 = vector.extract_strided_slice %91 {offsets = [0, 384], sizes = [4, 128], strides = [1, 1]} : vector<4x512xf32> to vector<4x128xf32>
    %107 = arith.negf %106 : vector<4x128xf32>
    %108 = math.exp %107 : vector<4x128xf32>
    %cst_29 = arith.constant 1.000000e+00 : f32
    %109 = vector.broadcast %cst_29 : f32 to vector<4x128xf32>
    %110 = arith.addf %109, %108 : vector<4x128xf32>
    %111 = arith.divf %109, %110 : vector<4x128xf32>
    %112 = arith.mulf %103, %76 : vector<4x128xf32>
    %113 = arith.mulf %97, %105 : vector<4x128xf32>
    %114 = arith.addf %112, %113 : vector<4x128xf32>
    %115 = math.tanh %114 : vector<4x128xf32>
    %116 = arith.mulf %111, %115 : vector<4x128xf32>
    %117 = arith.index_cast %c2_i32 : i32 to index
    %c0_30 = arith.constant 0 : index
    %c0_31 = arith.constant 0 : index
    %118 = vector.load %arg5[%117, %c0_30, %c0_31] : memref<8x4x128xf32, #tpu.memory_space<vmem>>, vector<1x4x128xf32>
    %119 = vector.shape_cast %118 : vector<1x4x128xf32> to vector<4x128xf32>
    %120 = vector.shape_cast %116 : vector<4x128xf32> to vector<1x4x128xf32>
    tpu.vector_store %arg5[%117, %c0_30, %c0_31], %120 {strides = array<i32>} : memref<8x4x128xf32, #tpu.memory_space<vmem>>, vector<1x4x128xf32>,
    %c3_i32 = arith.constant 3 : i32
    %121 = arith.index_cast %c3_i32 : i32 to index
    %c0_32 = arith.constant 0 : index
    %c0_33 = arith.constant 0 : index
    %122 = vector.load %arg2[%121, %c0_32, %c0_33] : memref<8x4x512xbf16, #tpu.memory_space<vmem>>, vector<1x4x512xbf16>
    %123 = vector.shape_cast %122 : vector<1x4x512xbf16> to vector<4x512xbf16>
    %124 = arith.truncf %116 : vector<4x128xf32> to vector<4x128xbf16>
    %cst_34 = arith.constant dense<0.000000e+00> : vector<4x512xf32>
    %125 = tpu.matmul %124, %3, %cst_34 {dimension_numbers = #tpu.dot_dimension_numbers<[1], [0], [0], [1], [0, 0, 1, 1], [], []>} : vector<4x128xbf16>, vector<128x512xbf16>, vector<4x512xf32> -> vector<4x512xf32>
    %126 = arith.extf %123 : vector<4x512xbf16> to vector<4x512xf32>
    %127 = arith.addf %125, %126 : vector<4x512xf32>
    %128 = vector.broadcast %4 : vector<1x512xf32> to vector<4x512xf32>
    %129 = arith.addf %127, %128 : vector<4x512xf32>
    %130 = vector.extract_strided_slice %129 {offsets = [0, 0], sizes = [4, 128], strides = [1, 1]} : vector<4x512xf32> to vector<4x128xf32>
    %131 = arith.negf %130 : vector<4x128xf32>
    %132 = math.exp %131 : vector<4x128xf32>
    %cst_35 = arith.constant 1.000000e+00 : f32
    %133 = vector.broadcast %cst_35 : f32 to vector<4x128xf32>
    %134 = arith.addf %133, %132 : vector<4x128xf32>
    %135 = arith.divf %133, %134 : vector<4x128xf32>
    %136 = vector.extract_strided_slice %129 {offsets = [0, 128], sizes = [4, 128], strides = [1, 1]} : vector<4x512xf32> to vector<4x128xf32>
    %137 = arith.negf %136 : vector<4x128xf32>
    %138 = math.exp %137 : vector<4x128xf32>
    %cst_36 = arith.constant 1.000000e+00 : f32
    %139 = vector.broadcast %cst_36 : f32 to vector<4x128xf32>
    %140 = arith.addf %139, %138 : vector<4x128xf32>
    %141 = arith.divf %139, %140 : vector<4x128xf32>
    %142 = vector.extract_strided_slice %129 {offsets = [0, 256], sizes = [4, 128], strides = [1, 1]} : vector<4x512xf32> to vector<4x128xf32>
    %143 = math.tanh %142 : vector<4x128xf32>
    %144 = vector.extract_strided_slice %129 {offsets = [0, 384], sizes = [4, 128], strides = [1, 1]} : vector<4x512xf32> to vector<4x128xf32>
    %145 = arith.negf %144 : vector<4x128xf32>
    %146 = math.exp %145 : vector<4x128xf32>
    %cst_37 = arith.constant 1.000000e+00 : f32
    %147 = vector.broadcast %cst_37 : f32 to vector<4x128xf32>
    %148 = arith.addf %147, %146 : vector<4x128xf32>
    %149 = arith.divf %147, %148 : vector<4x128xf32>
    %150 = arith.mulf %141, %114 : vector<4x128xf32>
    %151 = arith.mulf %135, %143 : vector<4x128xf32>
    %152 = arith.addf %150, %151 : vector<4x128xf32>
    %153 = math.tanh %152 : vector<4x128xf32>
    %154 = arith.mulf %149, %153 : vector<4x128xf32>
    %155 = arith.index_cast %c3_i32 : i32 to index
    %c0_38 = arith.constant 0 : index
    %c0_39 = arith.constant 0 : index
    %156 = vector.load %arg5[%155, %c0_38, %c0_39] : memref<8x4x128xf32, #tpu.memory_space<vmem>>, vector<1x4x128xf32>
    %157 = vector.shape_cast %156 : vector<1x4x128xf32> to vector<4x128xf32>
    %158 = vector.shape_cast %154 : vector<4x128xf32> to vector<1x4x128xf32>
    tpu.vector_store %arg5[%155, %c0_38, %c0_39], %158 {strides = array<i32>} : memref<8x4x128xf32, #tpu.memory_space<vmem>>, vector<1x4x128xf32>,
    %c4_i32 = arith.constant 4 : i32
    %159 = arith.index_cast %c4_i32 : i32 to index
    %c0_40 = arith.constant 0 : index
    %c0_41 = arith.constant 0 : index
    %160 = vector.load %arg2[%159, %c0_40, %c0_41] : memref<8x4x512xbf16, #tpu.memory_space<vmem>>, vector<1x4x512xbf16>
    %161 = vector.shape_cast %160 : vector<1x4x512xbf16> to vector<4x512xbf16>
    %162 = arith.truncf %154 : vector<4x128xf32> to vector<4x128xbf16>
    %cst_42 = arith.constant dense<0.000000e+00> : vector<4x512xf32>
    %163 = tpu.matmul %162, %3, %cst_42 {dimension_numbers = #tpu.dot_dimension_numbers<[1], [0], [0], [1], [0, 0, 1, 1], [], []>} : vector<4x128xbf16>, vector<128x512xbf16>, vector<4x512xf32> -> vector<4x512xf32>
    %164 = arith.extf %161 : vector<4x512xbf16> to vector<4x512xf32>
    %165 = arith.addf %163, %164 : vector<4x512xf32>
    %166 = vector.broadcast %4 : vector<1x512xf32> to vector<4x512xf32>
    %167 = arith.addf %165, %166 : vector<4x512xf32>
    %168 = vector.extract_strided_slice %167 {offsets = [0, 0], sizes = [4, 128], strides = [1, 1]} : vector<4x512xf32> to vector<4x128xf32>
    %169 = arith.negf %168 : vector<4x128xf32>
    %170 = math.exp %169 : vector<4x128xf32>
    %cst_43 = arith.constant 1.000000e+00 : f32
    %171 = vector.broadcast %cst_43 : f32 to vector<4x128xf32>
    %172 = arith.addf %171, %170 : vector<4x128xf32>
    %173 = arith.divf %171, %172 : vector<4x128xf32>
    %174 = vector.extract_strided_slice %167 {offsets = [0, 128], sizes = [4, 128], strides = [1, 1]} : vector<4x512xf32> to vector<4x128xf32>
    %175 = arith.negf %174 : vector<4x128xf32>
    %176 = math.exp %175 : vector<4x128xf32>
    %cst_44 = arith.constant 1.000000e+00 : f32
    %177 = vector.broadcast %cst_44 : f32 to vector<4x128xf32>
    %178 = arith.addf %177, %176 : vector<4x128xf32>
    %179 = arith.divf %177, %178 : vector<4x128xf32>
    %180 = vector.extract_strided_slice %167 {offsets = [0, 256], sizes = [4, 128], strides = [1, 1]} : vector<4x512xf32> to vector<4x128xf32>
    %181 = math.tanh %180 : vector<4x128xf32>
    %182 = vector.extract_strided_slice %167 {offsets = [0, 384], sizes = [4, 128], strides = [1, 1]} : vector<4x512xf32> to vector<4x128xf32>
    %183 = arith.negf %182 : vector<4x128xf32>
    %184 = math.exp %183 : vector<4x128xf32>
    %cst_45 = arith.constant 1.000000e+00 : f32
    %185 = vector.broadcast %cst_45 : f32 to vector<4x128xf32>
    %186 = arith.addf %185, %184 : vector<4x128xf32>
    %187 = arith.divf %185, %186 : vector<4x128xf32>
    %188 = arith.mulf %179, %152 : vector<4x128xf32>
    %189 = arith.mulf %173, %181 : vector<4x128xf32>
    %190 = arith.addf %188, %189 : vector<4x128xf32>
    %191 = math.tanh %190 : vector<4x128xf32>
    %192 = arith.mulf %187, %191 : vector<4x128xf32>
    %193 = arith.index_cast %c4_i32 : i32 to index
    %c0_46 = arith.constant 0 : index
    %c0_47 = arith.constant 0 : index
    %194 = vector.load %arg5[%193, %c0_46, %c0_47] : memref<8x4x128xf32, #tpu.memory_space<vmem>>, vector<1x4x128xf32>
    %195 = vector.shape_cast %194 : vector<1x4x128xf32> to vector<4x128xf32>
    %196 = vector.shape_cast %192 : vector<4x128xf32> to vector<1x4x128xf32>
    tpu.vector_store %arg5[%193, %c0_46, %c0_47], %196 {strides = array<i32>} : memref<8x4x128xf32, #tpu.memory_space<vmem>>, vector<1x4x128xf32>,
    %c5_i32 = arith.constant 5 : i32
    %197 = arith.index_cast %c5_i32 : i32 to index
    %c0_48 = arith.constant 0 : index
    %c0_49 = arith.constant 0 : index
    %198 = vector.load %arg2[%197, %c0_48, %c0_49] : memref<8x4x512xbf16, #tpu.memory_space<vmem>>, vector<1x4x512xbf16>
    %199 = vector.shape_cast %198 : vector<1x4x512xbf16> to vector<4x512xbf16>
    %200 = arith.truncf %192 : vector<4x128xf32> to vector<4x128xbf16>
    %cst_50 = arith.constant dense<0.000000e+00> : vector<4x512xf32>
    %201 = tpu.matmul %200, %3, %cst_50 {dimension_numbers = #tpu.dot_dimension_numbers<[1], [0], [0], [1], [0, 0, 1, 1], [], []>} : vector<4x128xbf16>, vector<128x512xbf16>, vector<4x512xf32> -> vector<4x512xf32>
    %202 = arith.extf %199 : vector<4x512xbf16> to vector<4x512xf32>
    %203 = arith.addf %201, %202 : vector<4x512xf32>
    %204 = vector.broadcast %4 : vector<1x512xf32> to vector<4x512xf32>
    %205 = arith.addf %203, %204 : vector<4x512xf32>
    %206 = vector.extract_strided_slice %205 {offsets = [0, 0], sizes = [4, 128], strides = [1, 1]} : vector<4x512xf32> to vector<4x128xf32>
    %207 = arith.negf %206 : vector<4x128xf32>
    %208 = math.exp %207 : vector<4x128xf32>
    %cst_51 = arith.constant 1.000000e+00 : f32
    %209 = vector.broadcast %cst_51 : f32 to vector<4x128xf32>
    %210 = arith.addf %209, %208 : vector<4x128xf32>
    %211 = arith.divf %209, %210 : vector<4x128xf32>
    %212 = vector.extract_strided_slice %205 {offsets = [0, 128], sizes = [4, 128], strides = [1, 1]} : vector<4x512xf32> to vector<4x128xf32>
    %213 = arith.negf %212 : vector<4x128xf32>
    %214 = math.exp %213 : vector<4x128xf32>
    %cst_52 = arith.constant 1.000000e+00 : f32
    %215 = vector.broadcast %cst_52 : f32 to vector<4x128xf32>
    %216 = arith.addf %215, %214 : vector<4x128xf32>
    %217 = arith.divf %215, %216 : vector<4x128xf32>
    %218 = vector.extract_strided_slice %205 {offsets = [0, 256], sizes = [4, 128], strides = [1, 1]} : vector<4x512xf32> to vector<4x128xf32>
    %219 = math.tanh %218 : vector<4x128xf32>
    %220 = vector.extract_strided_slice %205 {offsets = [0, 384], sizes = [4, 128], strides = [1, 1]} : vector<4x512xf32> to vector<4x128xf32>
    %221 = arith.negf %220 : vector<4x128xf32>
    %222 = math.exp %221 : vector<4x128xf32>
    %cst_53 = arith.constant 1.000000e+00 : f32
    %223 = vector.broadcast %cst_53 : f32 to vector<4x128xf32>
    %224 = arith.addf %223, %222 : vector<4x128xf32>
    %225 = arith.divf %223, %224 : vector<4x128xf32>
    %226 = arith.mulf %217, %190 : vector<4x128xf32>
    %227 = arith.mulf %211, %219 : vector<4x128xf32>
    %228 = arith.addf %226, %227 : vector<4x128xf32>
    %229 = math.tanh %228 : vector<4x128xf32>
    %230 = arith.mulf %225, %229 : vector<4x128xf32>
    %231 = arith.index_cast %c5_i32 : i32 to index
    %c0_54 = arith.constant 0 : index
    %c0_55 = arith.constant 0 : index
    %232 = vector.load %arg5[%231, %c0_54, %c0_55] : memref<8x4x128xf32, #tpu.memory_space<vmem>>, vector<1x4x128xf32>
    %233 = vector.shape_cast %232 : vector<1x4x128xf32> to vector<4x128xf32>
    %234 = vector.shape_cast %230 : vector<4x128xf32> to vector<1x4x128xf32>
    tpu.vector_store %arg5[%231, %c0_54, %c0_55], %234 {strides = array<i32>} : memref<8x4x128xf32, #tpu.memory_space<vmem>>, vector<1x4x128xf32>,
    %c6_i32 = arith.constant 6 : i32
    %235 = arith.index_cast %c6_i32 : i32 to index
    %c0_56 = arith.constant 0 : index
    %c0_57 = arith.constant 0 : index
    %236 = vector.load %arg2[%235, %c0_56, %c0_57] : memref<8x4x512xbf16, #tpu.memory_space<vmem>>, vector<1x4x512xbf16>
    %237 = vector.shape_cast %236 : vector<1x4x512xbf16> to vector<4x512xbf16>
    %238 = arith.truncf %230 : vector<4x128xf32> to vector<4x128xbf16>
    %cst_58 = arith.constant dense<0.000000e+00> : vector<4x512xf32>
    %239 = tpu.matmul %238, %3, %cst_58 {dimension_numbers = #tpu.dot_dimension_numbers<[1], [0], [0], [1], [0, 0, 1, 1], [], []>} : vector<4x128xbf16>, vector<128x512xbf16>, vector<4x512xf32> -> vector<4x512xf32>
    %240 = arith.extf %237 : vector<4x512xbf16> to vector<4x512xf32>
    %241 = arith.addf %239, %240 : vector<4x512xf32>
    %242 = vector.broadcast %4 : vector<1x512xf32> to vector<4x512xf32>
    %243 = arith.addf %241, %242 : vector<4x512xf32>
    %244 = vector.extract_strided_slice %243 {offsets = [0, 0], sizes = [4, 128], strides = [1, 1]} : vector<4x512xf32> to vector<4x128xf32>
    %245 = arith.negf %244 : vector<4x128xf32>
    %246 = math.exp %245 : vector<4x128xf32>
    %cst_59 = arith.constant 1.000000e+00 : f32
    %247 = vector.broadcast %cst_59 : f32 to vector<4x128xf32>
    %248 = arith.addf %247, %246 : vector<4x128xf32>
    %249 = arith.divf %247, %248 : vector<4x128xf32>
    %250 = vector.extract_strided_slice %243 {offsets = [0, 128], sizes = [4, 128], strides = [1, 1]} : vector<4x512xf32> to vector<4x128xf32>
    %251 = arith.negf %250 : vector<4x128xf32>
    %252 = math.exp %251 : vector<4x128xf32>
    %cst_60 = arith.constant 1.000000e+00 : f32
    %253 = vector.broadcast %cst_60 : f32 to vector<4x128xf32>
    %254 = arith.addf %253, %252 : vector<4x128xf32>
    %255 = arith.divf %253, %254 : vector<4x128xf32>
    %256 = vector.extract_strided_slice %243 {offsets = [0, 256], sizes = [4, 128], strides = [1, 1]} : vector<4x512xf32> to vector<4x128xf32>
    %257 = math.tanh %256 : vector<4x128xf32>
    %258 = vector.extract_strided_slice %243 {offsets = [0, 384], sizes = [4, 128], strides = [1, 1]} : vector<4x512xf32> to vector<4x128xf32>
    %259 = arith.negf %258 : vector<4x128xf32>
    %260 = math.exp %259 : vector<4x128xf32>
    %cst_61 = arith.constant 1.000000e+00 : f32
    %261 = vector.broadcast %cst_61 : f32 to vector<4x128xf32>
    %262 = arith.addf %261, %260 : vector<4x128xf32>
    %263 = arith.divf %261, %262 : vector<4x128xf32>
    %264 = arith.mulf %255, %228 : vector<4x128xf32>
    %265 = arith.mulf %249, %257 : vector<4x128xf32>
    %266 = arith.addf %264, %265 : vector<4x128xf32>
    %267 = math.tanh %266 : vector<4x128xf32>
    %268 = arith.mulf %263, %267 : vector<4x128xf32>
    %269 = arith.index_cast %c6_i32 : i32 to index
    %c0_62 = arith.constant 0 : index
    %c0_63 = arith.constant 0 : index
    %270 = vector.load %arg5[%269, %c0_62, %c0_63] : memref<8x4x128xf32, #tpu.memory_space<vmem>>, vector<1x4x128xf32>
    %271 = vector.shape_cast %270 : vector<1x4x128xf32> to vector<4x128xf32>
    %272 = vector.shape_cast %268 : vector<4x128xf32> to vector<1x4x128xf32>
    tpu.vector_store %arg5[%269, %c0_62, %c0_63], %272 {strides = array<i32>} : memref<8x4x128xf32, #tpu.memory_space<vmem>>, vector<1x4x128xf32>,
    %c7_i32 = arith.constant 7 : i32
    %273 = arith.index_cast %c7_i32 : i32 to index
    %c0_64 = arith.constant 0 : index
    %c0_65 = arith.constant 0 : index
    %274 = vector.load %arg2[%273, %c0_64, %c0_65] : memref<8x4x512xbf16, #tpu.memory_space<vmem>>, vector<1x4x512xbf16>
    %275 = vector.shape_cast %274 : vector<1x4x512xbf16> to vector<4x512xbf16>
    %276 = arith.truncf %268 : vector<4x128xf32> to vector<4x128xbf16>
    %cst_66 = arith.constant dense<0.000000e+00> : vector<4x512xf32>
    %277 = tpu.matmul %276, %3, %cst_66 {dimension_numbers = #tpu.dot_dimension_numbers<[1], [0], [0], [1], [0, 0, 1, 1], [], []>} : vector<4x128xbf16>, vector<128x512xbf16>, vector<4x512xf32> -> vector<4x512xf32>
    %278 = arith.extf %275 : vector<4x512xbf16> to vector<4x512xf32>
    %279 = arith.addf %277, %278 : vector<4x512xf32>
    %280 = vector.broadcast %4 : vector<1x512xf32> to vector<4x512xf32>
    %281 = arith.addf %279, %280 : vector<4x512xf32>
    %282 = vector.extract_strided_slice %281 {offsets = [0, 0], sizes = [4, 128], strides = [1, 1]} : vector<4x512xf32> to vector<4x128xf32>
    %283 = arith.negf %282 : vector<4x128xf32>
    %284 = math.exp %283 : vector<4x128xf32>
    %cst_67 = arith.constant 1.000000e+00 : f32
    %285 = vector.broadcast %cst_67 : f32 to vector<4x128xf32>
    %286 = arith.addf %285, %284 : vector<4x128xf32>
    %287 = arith.divf %285, %286 : vector<4x128xf32>
    %288 = vector.extract_strided_slice %281 {offsets = [0, 128], sizes = [4, 128], strides = [1, 1]} : vector<4x512xf32> to vector<4x128xf32>
    %289 = arith.negf %288 : vector<4x128xf32>
    %290 = math.exp %289 : vector<4x128xf32>
    %cst_68 = arith.constant 1.000000e+00 : f32
    %291 = vector.broadcast %cst_68 : f32 to vector<4x128xf32>
    %292 = arith.addf %291, %290 : vector<4x128xf32>
    %293 = arith.divf %291, %292 : vector<4x128xf32>
    %294 = vector.extract_strided_slice %281 {offsets = [0, 256], sizes = [4, 128], strides = [1, 1]} : vector<4x512xf32> to vector<4x128xf32>
    %295 = math.tanh %294 : vector<4x128xf32>
    %296 = vector.extract_strided_slice %281 {offsets = [0, 384], sizes = [4, 128], strides = [1, 1]} : vector<4x512xf32> to vector<4x128xf32>
    %297 = arith.negf %296 : vector<4x128xf32>
    %298 = math.exp %297 : vector<4x128xf32>
    %cst_69 = arith.constant 1.000000e+00 : f32
    %299 = vector.broadcast %cst_69 : f32 to vector<4x128xf32>
    %300 = arith.addf %299, %298 : vector<4x128xf32>
    %301 = arith.divf %299, %300 : vector<4x128xf32>
    %302 = arith.mulf %293, %266 : vector<4x128xf32>
    %303 = arith.mulf %287, %295 : vector<4x128xf32>
    %304 = arith.addf %302, %303 : vector<4x128xf32>
    %305 = math.tanh %304 : vector<4x128xf32>
    %306 = arith.mulf %301, %305 : vector<4x128xf32>
    %307 = arith.index_cast %c7_i32 : i32 to index
    %c0_70 = arith.constant 0 : index
    %c0_71 = arith.constant 0 : index
    %308 = vector.load %arg5[%307, %c0_70, %c0_71] : memref<8x4x128xf32, #tpu.memory_space<vmem>>, vector<1x4x128xf32>
    %309 = vector.shape_cast %308 : vector<1x4x128xf32> to vector<4x128xf32>
    %310 = vector.shape_cast %306 : vector<4x128xf32> to vector<1x4x128xf32>
    tpu.vector_store %arg5[%307, %c0_70, %c0_71], %310 {strides = array<i32>} : memref<8x4x128xf32, #tpu.memory_space<vmem>>, vector<1x4x128xf32>,
    %c8_i32 = arith.constant 8 : i32
    %c0_72 = arith.constant 0 : index
    %c0_73 = arith.constant 0 : index
    %311 = vector.load %arg8[%c0_72, %c0_73] : memref<4x128xf32, #tpu.memory_space<vmem>>, vector<4x128xf32>
    tpu.vector_store %arg8[%c0_72, %c0_73], %306 {strides = array<i32>} : memref<4x128xf32, #tpu.memory_space<vmem>>, vector<4x128xf32>,
    %c0_74 = arith.constant 0 : index
    %c0_75 = arith.constant 0 : index
    %312 = vector.load %arg9[%c0_74, %c0_75] : memref<4x128xf32, #tpu.memory_space<vmem>>, vector<4x128xf32>
    tpu.vector_store %arg9[%c0_74, %c0_75], %304 {strides = array<i32>} : memref<4x128xf32, #tpu.memory_space<vmem>>, vector<4x128xf32>,
    %c0_i32_76 = arith.constant 0 : i32
    %313 = arith.cmpi eq, %arg1, %c0_i32_76 : i32
    %314 = arith.extui %313 : i1 to i32
    %c0_i32_77 = arith.constant 0 : i32
    %315 = arith.cmpi ne, %314, %c0_i32_77 : i32
    scf.if %315 {
      %c0_78 = arith.constant 0 : index
      %c0_79 = arith.constant 0 : index
      %316 = vector.load %arg8[%c0_78, %c0_79] : memref<4x128xf32, #tpu.memory_space<vmem>>, vector<4x128xf32>
      %c0_80 = arith.constant 0 : index
      %c0_81 = arith.constant 0 : index
      %317 = vector.load %arg6[%c0_80, %c0_81] : memref<4x128xf32, #tpu.memory_space<vmem>>, vector<4x128xf32>
      tpu.vector_store %arg6[%c0_80, %c0_81], %316 {strides = array<i32>} : memref<4x128xf32, #tpu.memory_space<vmem>>, vector<4x128xf32>,
      %c0_82 = arith.constant 0 : index
      %c0_83 = arith.constant 0 : index
      %318 = vector.load %arg9[%c0_82, %c0_83] : memref<4x128xf32, #tpu.memory_space<vmem>>, vector<4x128xf32>
      %c0_84 = arith.constant 0 : index
      %c0_85 = arith.constant 0 : index
      %319 = vector.load %arg7[%c0_84, %c0_85] : memref<4x128xf32, #tpu.memory_space<vmem>>, vector<4x128xf32>
      tpu.vector_store %arg7[%c0_84, %c0_85], %318 {strides = array<i32>} : memref<4x128xf32, #tpu.memory_space<vmem>>, vector<4x128xf32>,
    } else {
    }
    return
  }
  func.func @transform_0(%arg0: i32, %arg1: i32) -> (i32, i32, i32) {
    %c0_i32 = arith.constant 0 : i32
    %c0_i32_0 = arith.constant 0 : i32
    return %arg1, %arg0, %c0_i32 : i32, i32, i32
  }
  func.func @transform_1(%arg0: i32, %arg1: i32) -> (i32, i32) {
    %c0_i32 = arith.constant 0 : i32
    %c0_i32_0 = arith.constant 0 : i32
    %c0_i32_1 = arith.constant 0 : i32
    return %c0_i32, %c0_i32_0 : i32, i32
  }
  func.func @transform_2(%arg0: i32, %arg1: i32) -> (i32, i32) {
    %c0_i32 = arith.constant 0 : i32
    %c0_i32_0 = arith.constant 0 : i32
    %c0_i32_1 = arith.constant 0 : i32
    return %c0_i32, %c0_i32_0 : i32, i32
  }
  func.func @transform_3(%arg0: i32, %arg1: i32) -> (i32, i32, i32) {
    %c0_i32 = arith.constant 0 : i32
    %c0_i32_0 = arith.constant 0 : i32
    return %arg1, %arg0, %c0_i32 : i32, i32, i32
  }
  func.func @transform_4(%arg0: i32, %arg1: i32) -> (i32, i32) {
    %c0_i32 = arith.constant 0 : i32
    %c0_i32_0 = arith.constant 0 : i32
    return %arg0, %c0_i32 : i32, i32
  }
  func.func @transform_5(%arg0: i32, %arg1: i32) -> (i32, i32) {
    %c0_i32 = arith.constant 0 : i32
    %c0_i32_0 = arith.constant 0 : i32
    return %arg0, %c0_i32 : i32, i32
  }
}

</mosaic_0001>

<llo_original>
// kernel: lstm_layer_forward.1
$region0: #{lstm_layer_forward.1}
  #allocation0 [shape = 'u32[]', space=smem, size = 0x4, offset = 0x4, fixed_abs, tag = 'smem constant byte address 0x4 - core index']
  #allocation1 [shape = 'u32[72,128]{1,0:T(1,128)}', space=vmem, size = 0x9000, scoped, tag = 'internal scratch']
  #allocation2 [shape = 'f32[4,128]{1,0:T(4,128)}', space=vmem, size = 0x800, scoped, tag = 'scratch operand']
  #allocation3 [shape = 'f32[4,128]{1,0:T(4,128)}', space=vmem, size = 0x800, scoped, tag = 'scratch operand']
  %s0 = inlined_call_operand.vmem [shape: bf16[8,4,512], index: 0, kind: input, shape index: {}]
  %s1 = inlined_call_operand.vmem [shape: bf16[128,512], index: 1, kind: input, shape index: {}]
  %s2 = inlined_call_operand.vmem [shape: f32[1,512], index: 2, kind: input, shape index: {}]
  %s3 = inlined_call_operand.vmem [shape: f32[8,4,128], index: 3, kind: output, shape index: {0}]
  %s4 = inlined_call_operand.vmem [shape: f32[4,128], index: 4, kind: output, shape index: {1}]
  %s5 = inlined_call_operand.vmem [shape: f32[4,128], index: 5, kind: output, shape index: {2}]
  %6 = xla_tuple %s3, %s4, %s5
  %s7 = sld [smem:[#allocation0]]
  $region46: #{lstm_layer_forward.1} parent=0
    _
  %s9 = ssub.s32 1, %s7
  %s10 = scalar_select 0, %s9, %s7
  // Predicated region
  $region2: #{lstm_layer_forward.1} parent=0 // pred_check
    _
  $region3: #{lstm_layer_forward.1} parent=0 // pred_check_branch
    %12 = sbr.rel (0) target = $region5
  $region4: #{lstm_layer_forward.1} parent=0 // pred_region
    _
  $region5: #{lstm_layer_forward.1} parent=0 // pred_fallthru
    _
  // Predicated region
  $region6: #{lstm_layer_forward.1} parent=0 // pred_check
    _
  $region7: #{lstm_layer_forward.1} parent=0 // pred_check_branch
    %14 = sbr.rel (0) target = $region9
  $region8: #{lstm_layer_forward.1} parent=0 // pred_region
    _
  $region9: #{lstm_layer_forward.1} parent=0 // pred_fallthru
    _
  // Predicated region
  $region10: #{lstm_layer_forward.1} parent=0 // pred_check
    _
  $region11: #{lstm_layer_forward.1} parent=0 // pred_check_branch
    %16 = sbr.rel (0) target = $region13
  $region12: #{lstm_layer_forward.1} parent=0 // pred_region
    _
  $region13: #{lstm_layer_forward.1} parent=0 // pred_fallthru
    _
  %p17 = scmp.eq.s32.totalorder 0, 0
  // Predicated region
  $region14: #{lstm_layer_forward.1} parent=0 // pred_check
    %p18 = pneg %p17
  $region15: #{lstm_layer_forward.1} parent=0 // pred_check_branch
    %20 = sbr.rel (%p18) target = $region17
  $region16: #{lstm_layer_forward.1} parent=0 // pred_region
    %21 = vst [vmem:[#allocation2] sm:$0xf] 0.0
    %22 = vst [vmem:[#allocation3] sm:$0xf] 0.0
  $region17: #{lstm_layer_forward.1} parent=0 // pred_fallthru
    _
  %v23 = vld [vmem:[%s1] sm:$0xff]
  %v24 = vld [vmem:[%s1 + $0x8] sm:$0xff]
  %v25 = vld [vmem:[%s1 + $0x10] sm:$0xff]
  %v26 = vld [vmem:[%s1 + $0x18] sm:$0xff]
  %v27 = vld [vmem:[%s1 + $0x20] sm:$0xff]
  %v28 = vld [vmem:[%s1 + $0x28] sm:$0xff]
  %v29 = vld [vmem:[%s1 + $0x30] sm:$0xff]
  %v30 = vld [vmem:[%s1 + $0x38] sm:$0xff]
  %v31 = vld [vmem:[%s1 + $0x40] sm:$0xff]
  %v32 = vld [vmem:[%s1 + $0x48] sm:$0xff]
  %v33 = vld [vmem:[%s1 + $0x50] sm:$0xff]
  %v34 = vld [vmem:[%s1 + $0x58] sm:$0xff]
  %v35 = vld [vmem:[%s1 + $0x60] sm:$0xff]
  %v36 = vld [vmem:[%s1 + $0x68] sm:$0xff]
  %v37 = vld [vmem:[%s1 + $0x70] sm:$0xff]
  %v38 = vld [vmem:[%s1 + $0x78] sm:$0xff]
  %v39 = vld [vmem:[%s1 + $0x80] sm:$0xff]
  %v40 = vld [vmem:[%s1 + $0x88] sm:$0xff]
  %v41 = vld [vmem:[%s1 + $0x90] sm:$0xff]
  %v42 = vld [vmem:[%s1 + $0x98] sm:$0xff]
  %v43 = vld [vmem:[%s1 + $0xa0] sm:$0xff]
  %v44 = vld [vmem:[%s1 + $0xa8] sm:$0xff]
  %v45 = vld [vmem:[%s1 + $0xb0] sm:$0xff]
  %v46 = vld [vmem:[%s1 + $0xb8] sm:$0xff]
  %v47 = vld [vmem:[%s1 + $0xc0] sm:$0xff]
  %v48 = vld [vmem:[%s1 + $0xc8] sm:$0xff]
  %v49 = vld [vmem:[%s1 + $0xd0] sm:$0xff]
  %v50 = vld [vmem:[%s1 + $0xd8] sm:$0xff]
  %v51 = vld [vmem:[%s1 + $0xe0] sm:$0xff]
  %v52 = vld [vmem:[%s1 + $0xe8] sm:$0xff]
  %v53 = vld [vmem:[%s1 + $0xf0] sm:$0xff]
  %v54 = vld [vmem:[%s1 + $0xf8] sm:$0xff]
  %v55 = vld [vmem:[%s2] sm:$0xf]
  %v56 = vld [vmem:[#allocation2] sm:$0xf]
  %v57 = vld [vmem:[#allocation3] sm:$0xf]
  %v58 = vld [vmem:[%s0] sm:$0xff]
  %v59 = vpack.c.bf16 %v56, %v56
  %v60 = vunpack.c.l.bf16 %v58
  %v61 = vunpack.c.h.bf16 %v58
  %v94 = vunpack.c.l.b16 %v23
  %v95 = vunpack.c.h.b16 %v23
  %v96 = vunpack.c.l.b16 %v24
  %v97 = vunpack.c.h.b16 %v24
  %v98 = vunpack.c.l.b16 %v25
  %v99 = vunpack.c.h.b16 %v25
  %v100 = vunpack.c.l.b16 %v26
  %v101 = vunpack.c.h.b16 %v26
  %v102 = vunpack.c.l.b16 %v27
  %v103 = vunpack.c.h.b16 %v27
  %v104 = vunpack.c.l.b16 %v28
  %v105 = vunpack.c.h.b16 %v28
  %v106 = vunpack.c.l.b16 %v29
  %v107 = vunpack.c.h.b16 %v29
  %v108 = vunpack.c.l.b16 %v30
  %v109 = vunpack.c.h.b16 %v30
  %v110 = vunpack.c.l.b16 %v31
  %v111 = vunpack.c.h.b16 %v31
  %v112 = vunpack.c.l.b16 %v32
  %v113 = vunpack.c.h.b16 %v32
  %v114 = vunpack.c.l.b16 %v33
  %v115 = vunpack.c.h.b16 %v33
  %v116 = vunpack.c.l.b16 %v34
  %v117 = vunpack.c.h.b16 %v34
  %v118 = vunpack.c.l.b16 %v35
  %v119 = vunpack.c.h.b16 %v35
  %v120 = vunpack.c.l.b16 %v36
  %v121 = vunpack.c.h.b16 %v36
  %v122 = vunpack.c.l.b16 %v37
  %v123 = vunpack.c.h.b16 %v37
  %v124 = vunpack.c.l.b16 %v38
  %v125 = vunpack.c.h.b16 %v38
  %v126 = vunpack.c.l.b16 %v39
  %v127 = vunpack.c.h.b16 %v39
  %v128 = vunpack.c.l.b16 %v40
  %v129 = vunpack.c.h.b16 %v40
  %v130 = vunpack.c.l.b16 %v41
  %v131 = vunpack.c.h.b16 %v41
  %v132 = vunpack.c.l.b16 %v42
  %v133 = vunpack.c.h.b16 %v42
  %v134 = vunpack.c.l.b16 %v43
  %v135 = vunpack.c.h.b16 %v43
  %v136 = vunpack.c.l.b16 %v44
  %v137 = vunpack.c.h.b16 %v44
  %v138 = vunpack.c.l.b16 %v45
  %v139 = vunpack.c.h.b16 %v45
  %v140 = vunpack.c.l.b16 %v46
  %v141 = vunpack.c.h.b16 %v46
  %v142 = vunpack.c.l.b16 %v47
  %v143 = vunpack.c.h.b16 %v47
  %v144 = vunpack.c.l.b16 %v48
  %v145 = vunpack.c.h.b16 %v48
  %v146 = vunpack.c.l.b16 %v49
  %v147 = vunpack.c.h.b16 %v49
  %v148 = vunpack.c.l.b16 %v50
  %v149 = vunpack.c.h.b16 %v50
  %v150 = vunpack.c.l.b16 %v51
  %v151 = vunpack.c.h.b16 %v51
  %v152 = vunpack.c.l.b16 %v52
  %v153 = vunpack.c.h.b16 %v52
  %v154 = vunpack.c.l.b16 %v53
  %v155 = vunpack.c.h.b16 %v53
  %v156 = vunpack.c.l.b16 %v54
  %v157 = vunpack.c.h.b16 %v54
  %v158 = vpack.c.b16 %v98, %v94
  %v159 = vpack.c.b16 %v99, %v95
  %v160 = vpack.c.b16 %v100, %v96
  %v161 = vpack.c.b16 %v101, %v97
  %v162 = vpack.c.b16 %v106, %v102
  %v163 = vpack.c.b16 %v107, %v103
  %v164 = vpack.c.b16 %v108, %v104
  %v165 = vpack.c.b16 %v109, %v105
  %v166 = vpack.c.b16 %v114, %v110
  %v167 = vpack.c.b16 %v115, %v111
  %v168 = vpack.c.b16 %v116, %v112
  %v169 = vpack.c.b16 %v117, %v113
  %v170 = vpack.c.b16 %v122, %v118
  %v171 = vpack.c.b16 %v123, %v119
  %v172 = vpack.c.b16 %v124, %v120
  %v173 = vpack.c.b16 %v125, %v121
  %v174 = vpack.c.b16 %v130, %v126
  %v175 = vpack.c.b16 %v131, %v127
  %v176 = vpack.c.b16 %v132, %v128
  %v177 = vpack.c.b16 %v133, %v129
  %v178 = vpack.c.b16 %v138, %v134
  %v179 = vpack.c.b16 %v139, %v135
  %v180 = vpack.c.b16 %v140, %v136
  %v181 = vpack.c.b16 %v141, %v137
  %v182 = vpack.c.b16 %v146, %v142
  %v183 = vpack.c.b16 %v147, %v143
  %v184 = vpack.c.b16 %v148, %v144
  %v185 = vpack.c.b16 %v149, %v145
  %v186 = vpack.c.b16 %v154, %v150
  %v187 = vpack.c.b16 %v155, %v151
  %v188 = vpack.c.b16 %v156, %v152
  %v189 = vpack.c.b16 %v157, %v153
  %224 = vst [vmem:[#allocation1] ss:$2 sm:$0xff] %v60
  %s225 = scalar_lea.vmem [#allocation1], 16
  %226 = vst [vmem:[%s225] ss:$2 sm:$0xff] %v61
  %v227 = vld.sshfl [vmem:[#allocation1] sm:$0xff pattern:$0x75316420]
  %v228 = vld.sshfl [vmem:[#allocation1 + $0x8] sm:$0xff pattern:$0x75316420]
  %v229 = vld.sshfl [vmem:[#allocation1 + $0x10] sm:$0xff pattern:$0x75316420]
  %v230 = vld.sshfl [vmem:[#allocation1 + $0x18] sm:$0xff pattern:$0x75316420]
  %235 = vmatpush.bf16.msra.mxu0 %v186
  %236 = vmatpush.bf16.msra.mxu0 %v182
  %237 = vmatpush.bf16.msra.mxu0 %v178
  %238 = vmatpush.bf16.msra.mxu0 %v174
  %239 = vmatpush.bf16.msra.mxu0 %v170
  %240 = vmatpush.bf16.msra.mxu0 %v166
  %241 = vmatpush.bf16.msra.mxu0 %v162
  %242 = vmatpush.bf16.msra.mxu0 %v158
  %243 = vmatmul.bf16.gmra.mxu0 %v59
  %v244 = vpop.f32.mrf.mxu0
  %v245 = vadd.f32 %v227, %v244
  %v246 = vpop.f32.mrf.mxu0
  %247 = vdwg.mxu0
  %248 = vmatpush.bf16.msra.mxu0 %v187
  %249 = vmatpush.bf16.msra.mxu0 %v183
  %250 = vmatpush.bf16.msra.mxu0 %v179
  %251 = vmatpush.bf16.msra.mxu0 %v175
  %252 = vmatpush.bf16.msra.mxu0 %v171
  %253 = vmatpush.bf16.msra.mxu0 %v167
  %254 = vmatpush.bf16.msra.mxu0 %v163
  %255 = vmatpush.bf16.msra.mxu0 %v159
  %256 = vmatmul.bf16.gmra.mxu0 %v59
  %v257 = vpop.f32.mrf.mxu0
  %v258 = vadd.f32 %v228, %v257
  %v259 = vpop.f32.mrf.mxu0
  %260 = vdwg.mxu0
  %261 = vmatpush.bf16.msra.mxu0 %v188
  %262 = vmatpush.bf16.msra.mxu0 %v184
  %263 = vmatpush.bf16.msra.mxu0 %v180
  %264 = vmatpush.bf16.msra.mxu0 %v176
  %265 = vmatpush.bf16.msra.mxu0 %v172
  %266 = vmatpush.bf16.msra.mxu0 %v168
  %267 = vmatpush.bf16.msra.mxu0 %v164
  %268 = vmatpush.bf16.msra.mxu0 %v160
  %269 = vmatmul.bf16.gmra.mxu0 %v59
  %v270 = vpop.f32.mrf.mxu0
  %v271 = vadd.f32 %v229, %v270
  %v272 = vpop.f32.mrf.mxu0
  %273 = vdwg.mxu0
  %274 = vmatpush.bf16.msra.mxu0 %v189
  %275 = vmatpush.bf16.msra.mxu0 %v185
  %276 = vmatpush.bf16.msra.mxu0 %v181
  %277 = vmatpush.bf16.msra.mxu0 %v177
  %278 = vmatpush.bf16.msra.mxu0 %v173
  %279 = vmatpush.bf16.msra.mxu0 %v169
  %280 = vmatpush.bf16.msra.mxu0 %v165
  %281 = vmatpush.bf16.msra.mxu0 %v161
  %282 = vmatmul.bf16.gmra.mxu0 %v59
  %v283 = vpop.f32.mrf.mxu0
  %v284 = vadd.f32 %v230, %v283
  %v285 = vpop.f32.mrf.mxu0
  %286 = vdwg.mxu0
  %v288 = vperm.slane %v55, 0
  %v289 = vperm.slane %v55, 1
  %v290 = vperm.slane %v55, 2
  %v291 = vperm.slane %v55, 3
  %v296 = vadd.f32 %v245, %v288
  %v297 = vadd.f32 %v258, %v289
  %v298 = vadd.f32 %v271, %v290
  %v299 = vadd.f32 %v284, %v291
  %v300 = vxor.u32 %v296, 2147483648
  %v301 = vmul.f32 %v300, 1.442695
  %v302 = vpow.pop %v301
  %v303 = vadd.f32 %v302, 1.0
  %v304 = vrcp.pop %v303
  %v305 = vmul.f32 %v303, %v304
  %v306 = vsub.f32 1.0, %v305
  %v307 = vmul.f32 %v304, %v306
  %v308 = vadd.f32 %v304, %v307
  %vm309 = vweird.f32 %v303
  %vm310 = vweird.f32 %v304
  %vm311 = vmor %vm309, %vm310
  %v312 = vsel %vm311, %v304, %v308
  %v313 = vand.u32 2147483647, %v303
  %vm314 = vcmp.eq.f32.partialorder %v313, 8.507059e+37
  %v315 = vand.u32 %v303, 2147483648
  %v316 = vor.u32 1.1754944e-38, %v315
  %v317 = vsel %vm314, %v316, %v312
  %v318 = vmul.f32 1.0, %v317
  %v319 = vxor.u32 %v297, 2147483648
  %v320 = vmul.f32 %v319, 1.442695
  %v321 = vpow.pop %v320
  %v322 = vadd.f32 %v321, 1.0
  %v323 = vrcp.pop %v322
  %v324 = vmul.f32 %v322, %v323
  %v325 = vsub.f32 1.0, %v324
  %v326 = vmul.f32 %v323, %v325
  %v327 = vadd.f32 %v323, %v326
  %vm328 = vweird.f32 %v322
  %vm329 = vweird.f32 %v323
  %vm330 = vmor %vm328, %vm329
  %v331 = vsel %vm330, %v323, %v327
  %v332 = vand.u32 2147483647, %v322
  %vm333 = vcmp.eq.f32.partialorder %v332, 8.507059e+37
  %v334 = vand.u32 %v322, 2147483648
  %v335 = vor.u32 1.1754944e-38, %v334
  %v336 = vsel %vm333, %v335, %v331
  %v337 = vmul.f32 1.0, %v336
  %v338 = vtanh.pop %v298
  %v339 = vxor.u32 %v299, 2147483648
  %v340 = vmul.f32 %v339, 1.442695
  %v341 = vpow.pop %v340
  %v342 = vadd.f32 %v341, 1.0
  %v343 = vrcp.pop %v342
  %v344 = vmul.f32 %v342, %v343
  %v345 = vsub.f32 1.0, %v344
  %v346 = vmul.f32 %v343, %v345
  %v347 = vadd.f32 %v343, %v346
  %vm348 = vweird.f32 %v342
  %vm349 = vweird.f32 %v343
  %vm350 = vmor %vm348, %vm349
  %v351 = vsel %vm350, %v343, %v347
  %v352 = vand.u32 2147483647, %v342
  %vm353 = vcmp.eq.f32.partialorder %v352, 8.507059e+37
  %v354 = vand.u32 %v342, 2147483648
  %v355 = vor.u32 1.1754944e-38, %v354
  %v356 = vsel %vm353, %v355, %v351
  %v357 = vmul.f32 1.0, %v356
  %v358 = vmul.f32 %v337, %v57
  %v359 = vmul.f32 %v318, %v338
  %v360 = vadd.f32 %v358, %v359
  %v361 = vtanh.pop %v360
  %v362 = vmul.f32 %v357, %v361
  %363 = vst [vmem:[%s3] sm:$0xf] %v362
  %s364 = scalar_lea.vmem %s0, 8
  %v365 = vld [vmem:[%s364] sm:$0xff]
  %v366 = vpack.c.bf16 %v362, %v362
  %v367 = vunpack.c.l.bf16 %v365
  %v368 = vunpack.c.h.bf16 %v365
  %371 = vst [vmem:[#allocation1] ss:$2 sm:$0xff] %v367
  %s372 = scalar_lea.vmem [#allocation1], 16
  %373 = vst [vmem:[%s372] ss:$2 sm:$0xff] %v368
  %v374 = vld.sshfl [vmem:[#allocation1] sm:$0xff pattern:$0x75316420]
  %v375 = vld.sshfl [vmem:[#allocation1 + $0x8] sm:$0xff pattern:$0x75316420]
  %v376 = vld.sshfl [vmem:[#allocation1 + $0x10] sm:$0xff pattern:$0x75316420]
  %v377 = vld.sshfl [vmem:[#allocation1 + $0x18] sm:$0xff pattern:$0x75316420]
  %382 = vmatpush.bf16.msra.mxu0 %v186
  %383 = vmatpush.bf16.msra.mxu0 %v182
  %384 = vmatpush.bf16.msra.mxu0 %v178
  %385 = vmatpush.bf16.msra.mxu0 %v174
  %386 = vmatpush.bf16.msra.mxu0 %v170
  %387 = vmatpush.bf16.msra.mxu0 %v166
  %388 = vmatpush.bf16.msra.mxu0 %v162
  %389 = vmatpush.bf16.msra.mxu0 %v158
  %390 = vmatmul.bf16.gmra.mxu0 %v366
  %v391 = vpop.f32.mrf.mxu0
  %v392 = vadd.f32 %v374, %v391
  %v393 = vpop.f32.mrf.mxu0
  %394 = vdwg.mxu0
  %395 = vmatpush.bf16.msra.mxu0 %v187
  %396 = vmatpush.bf16.msra.mxu0 %v183
  %397 = vmatpush.bf16.msra.mxu0 %v179
  %398 = vmatpush.bf16.msra.mxu0 %v175
  %399 = vmatpush.bf16.msra.mxu0 %v171
  %400 = vmatpush.bf16.msra.mxu0 %v167
  %401 = vmatpush.bf16.msra.mxu0 %v163
  %402 = vmatpush.bf16.msra.mxu0 %v159
  %403 = vmatmul.bf16.gmra.mxu0 %v366
  %v404 = vpop.f32.mrf.mxu0
  %v405 = vadd.f32 %v375, %v404
  %v406 = vpop.f32.mrf.mxu0
  %407 = vdwg.mxu0
  %408 = vmatpush.bf16.msra.mxu0 %v188
  %409 = vmatpush.bf16.msra.mxu0 %v184
  %410 = vmatpush.bf16.msra.mxu0 %v180
  %411 = vmatpush.bf16.msra.mxu0 %v176
  %412 = vmatpush.bf16.msra.mxu0 %v172
  %413 = vmatpush.bf16.msra.mxu0 %v168
  %414 = vmatpush.bf16.msra.mxu0 %v164
  %415 = vmatpush.bf16.msra.mxu0 %v160
  %416 = vmatmul.bf16.gmra.mxu0 %v366
  %v417 = vpop.f32.mrf.mxu0
  %v418 = vadd.f32 %v376, %v417
  %v419 = vpop.f32.mrf.mxu0
  %420 = vdwg.mxu0
  %421 = vmatpush.bf16.msra.mxu0 %v189
  %422 = vmatpush.bf16.msra.mxu0 %v185
  %423 = vmatpush.bf16.msra.mxu0 %v181
  %424 = vmatpush.bf16.msra.mxu0 %v177
  %425 = vmatpush.bf16.msra.mxu0 %v173
  %426 = vmatpush.bf16.msra.mxu0 %v169
  %427 = vmatpush.bf16.msra.mxu0 %v165
  %428 = vmatpush.bf16.msra.mxu0 %v161
  %429 = vmatmul.bf16.gmra.mxu0 %v366
  %v430 = vpop.f32.mrf.mxu0
  %v431 = vadd.f32 %v377, %v430
  %v432 = vpop.f32.mrf.mxu0
  %433 = vdwg.mxu0
  %v434 = vadd.f32 %v392, %v288
  %v435 = vadd.f32 %v405, %v289
  %v436 = vadd.f32 %v418, %v290
  %v437 = vadd.f32 %v431, %v291
  %v438 = vxor.u32 %v434, 2147483648
  %v439 = vmul.f32 %v438, 1.442695
  %v440 = vpow.pop %v439
  %v441 = vadd.f32 %v440, 1.0
  %v442 = vrcp.pop %v441
  %v443 = vmul.f32 %v441, %v442
  %v444 = vsub.f32 1.0, %v443
  %v445 = vmul.f32 %v442, %v444
  %v446 = vadd.f32 %v442, %v445
  %vm447 = vweird.f32 %v441
  %vm448 = vweird.f32 %v442
  %vm449 = vmor %vm447, %vm448
  %v450 = vsel %vm449, %v442, %v446
  %v451 = vand.u32 2147483647, %v441
  %vm452 = vcmp.eq.f32.partialorder %v451, 8.507059e+37
  %v453 = vand.u32 %v441, 2147483648
  %v454 = vor.u32 1.1754944e-38, %v453
  %v455 = vsel %vm452, %v454, %v450
  %v456 = vmul.f32 1.0, %v455
  %v457 = vxor.u32 %v435, 2147483648
  %v458 = vmul.f32 %v457, 1.442695
  %v459 = vpow.pop %v458
  %v460 = vadd.f32 %v459, 1.0
  %v461 = vrcp.pop %v460
  %v462 = vmul.f32 %v460, %v461
  %v463 = vsub.f32 1.0, %v462
  %v464 = vmul.f32 %v461, %v463
  %v465 = vadd.f32 %v461, %v464
  %vm466 = vweird.f32 %v460
  %vm467 = vweird.f32 %v461
  %vm468 = vmor %vm466, %vm467
  %v469 = vsel %vm468, %v461, %v465
  %v470 = vand.u32 2147483647, %v460
  %vm471 = vcmp.eq.f32.partialorder %v470, 8.507059e+37
  %v472 = vand.u32 %v460, 2147483648
  %v473 = vor.u32 1.1754944e-38, %v472
  %v474 = vsel %vm471, %v473, %v469
  %v475 = vmul.f32 1.0, %v474
  %v476 = vtanh.pop %v436
  %v477 = vxor.u32 %v437, 2147483648
  %v478 = vmul.f32 %v477, 1.442695
  %v479 = vpow.pop %v478
  %v480 = vadd.f32 %v479, 1.0
  %v481 = vrcp.pop %v480
  %v482 = vmul.f32 %v480, %v481
  %v483 = vsub.f32 1.0, %v482
  %v484 = vmul.f32 %v481, %v483
  %v485 = vadd.f32 %v481, %v484
  %vm486 = vweird.f32 %v480
  %vm487 = vweird.f32 %v481
  %vm488 = vmor %vm486, %vm487
  %v489 = vsel %vm488, %v481, %v485
  %v490 = vand.u32 2147483647, %v480
  %vm491 = vcmp.eq.f32.partialorder %v490, 8.507059e+37
  %v492 = vand.u32 %v480, 2147483648
  %v493 = vor.u32 1.1754944e-38, %v492
  %v494 = vsel %vm491, %v493, %v489
  %v495 = vmul.f32 1.0, %v494
  %v496 = vmul.f32 %v475, %v360
  %v497 = vmul.f32 %v456, %v476
  %v498 = vadd.f32 %v496, %v497
  %v499 = vtanh.pop %v498
  %v500 = vmul.f32 %v495, %v499
  %s501 = scalar_lea.vmem %s3, 4
  %502 = vst [vmem:[%s501] sm:$0xf] %v500
  %s503 = scalar_lea.vmem %s0, 16
  %v504 = vld [vmem:[%s503] sm:$0xff]
  %v505 = vpack.c.bf16 %v500, %v500
  %v506 = vunpack.c.l.bf16 %v504
  %v507 = vunpack.c.h.bf16 %v504
  %510 = vst [vmem:[#allocation1] ss:$2 sm:$0xff] %v506
  %s511 = scalar_lea.vmem [#allocation1], 16
  %512 = vst [vmem:[%s511] ss:$2 sm:$0xff] %v507
  %v513 = vld.sshfl [vmem:[#allocation1] sm:$0xff pattern:$0x75316420]
  %v514 = vld.sshfl [vmem:[#allocation1 + $0x8] sm:$0xff pattern:$0x75316420]
  %v515 = vld.sshfl [vmem:[#allocation1 + $0x10] sm:$0xff pattern:$0x75316420]
  %v516 = vld.sshfl [vmem:[#allocation1 + $0x18] sm:$0xff pattern:$0x75316420]
  %521 = vmatpush.bf16.msra.mxu0 %v186
  %522 = vmatpush.bf16.msra.mxu0 %v182
  %523 = vmatpush.bf16.msra.mxu0 %v178
  %524 = vmatpush.bf16.msra.mxu0 %v174
  %525 = vmatpush.bf16.msra.mxu0 %v170
  %526 = vmatpush.bf16.msra.mxu0 %v166
  %527 = vmatpush.bf16.msra.mxu0 %v162
  %528 = vmatpush.bf16.msra.mxu0 %v158
  %529 = vmatmul.bf16.gmra.mxu0 %v505
  %v530 = vpop.f32.mrf.mxu0
  %v531 = vadd.f32 %v513, %v530
  %v532 = vpop.f32.mrf.mxu0
  %533 = vdwg.mxu0
  %534 = vmatpush.bf16.msra.mxu0 %v187
  %535 = vmatpush.bf16.msra.mxu0 %v183
  %536 = vmatpush.bf16.msra.mxu0 %v179
  %537 = vmatpush.bf16.msra.mxu0 %v175
  %538 = vmatpush.bf16.msra.mxu0 %v171
  %539 = vmatpush.bf16.msra.mxu0 %v167
  %540 = vmatpush.bf16.msra.mxu0 %v163
  %541 = vmatpush.bf16.msra.mxu0 %v159
  %542 = vmatmul.bf16.gmra.mxu0 %v505
  %v543 = vpop.f32.mrf.mxu0
  %v544 = vadd.f32 %v514, %v543
  %v545 = vpop.f32.mrf.mxu0
  %546 = vdwg.mxu0
  %547 = vmatpush.bf16.msra.mxu0 %v188
  %548 = vmatpush.bf16.msra.mxu0 %v184
  %549 = vmatpush.bf16.msra.mxu0 %v180
  %550 = vmatpush.bf16.msra.mxu0 %v176
  %551 = vmatpush.bf16.msra.mxu0 %v172
  %552 = vmatpush.bf16.msra.mxu0 %v168
  %553 = vmatpush.bf16.msra.mxu0 %v164
  %554 = vmatpush.bf16.msra.mxu0 %v160
  %555 = vmatmul.bf16.gmra.mxu0 %v505
  %v556 = vpop.f32.mrf.mxu0
  %v557 = vadd.f32 %v515, %v556
  %v558 = vpop.f32.mrf.mxu0
  %559 = vdwg.mxu0
  %560 = vmatpush.bf16.msra.mxu0 %v189
  %561 = vmatpush.bf16.msra.mxu0 %v185
  %562 = vmatpush.bf16.msra.mxu0 %v181
  %563 = vmatpush.bf16.msra.mxu0 %v177
  %564 = vmatpush.bf16.msra.mxu0 %v173
  %565 = vmatpush.bf16.msra.mxu0 %v169
  %566 = vmatpush.bf16.msra.mxu0 %v165
  %567 = vmatpush.bf16.msra.mxu0 %v161
  %568 = vmatmul.bf16.gmra.mxu0 %v505
  %v569 = vpop.f32.mrf.mxu0
  %v570 = vadd.f32 %v516, %v569
  %v571 = vpop.f32.mrf.mxu0
  %572 = vdwg.mxu0
  %v573 = vadd.f32 %v531, %v288
  %v574 = vadd.f32 %v544, %v289
  %v575 = vadd.f32 %v557, %v290
  %v576 = vadd.f32 %v570, %v291
  %v577 = vxor.u32 %v573, 2147483648
  %v578 = vmul.f32 %v577, 1.442695
  %v579 = vpow.pop %v578
  %v580 = vadd.f32 %v579, 1.0
  %v581 = vrcp.pop %v580
  %v582 = vmul.f32 %v580, %v581
  %v583 = vsub.f32 1.0, %v582
  %v584 = vmul.f32 %v581, %v583
  %v585 = vadd.f32 %v581, %v584
  %vm586 = vweird.f32 %v580
  %vm587 = vweird.f32 %v581
  %vm588 = vmor %vm586, %vm587
  %v589 = vsel %vm588, %v581, %v585
  %v590 = vand.u32 2147483647, %v580
  %vm591 = vcmp.eq.f32.partialorder %v590, 8.507059e+37
  %v592 = vand.u32 %v580, 2147483648
  %v593 = vor.u32 1.1754944e-38, %v592
  %v594 = vsel %vm591, %v593, %v589
  %v595 = vmul.f32 1.0, %v594
  %v596 = vxor.u32 %v574, 2147483648
  %v597 = vmul.f32 %v596, 1.442695
  %v598 = vpow.pop %v597
  %v599 = vadd.f32 %v598, 1.0
  %v600 = vrcp.pop %v599
  %v601 = vmul.f32 %v599, %v600
  %v602 = vsub.f32 1.0, %v601
  %v603 = vmul.f32 %v600, %v602
  %v604 = vadd.f32 %v600, %v603
  %vm605 = vweird.f32 %v599
  %vm606 = vweird.f32 %v600
  %vm607 = vmor %vm605, %vm606
  %v608 = vsel %vm607, %v600, %v604
  %v609 = vand.u32 2147483647, %v599
  %vm610 = vcmp.eq.f32.partialorder %v609, 8.507059e+37
  %v611 = vand.u32 %v599, 2147483648
  %v612 = vor.u32 1.1754944e-38, %v611
  %v613 = vsel %vm610, %v612, %v608
  %v614 = vmul.f32 1.0, %v613
  %v615 = vtanh.pop %v575
  %v616 = vxor.u32 %v576, 2147483648
  %v617 = vmul.f32 %v616, 1.442695
  %v618 = vpow.pop %v617
  %v619 = vadd.f32 %v618, 1.0
  %v620 = vrcp.pop %v619
  %v621 = vmul.f32 %v619, %v620
  %v622 = vsub.f32 1.0, %v621
  %v623 = vmul.f32 %v620, %v622
  %v624 = vadd.f32 %v620, %v623
  %vm625 = vweird.f32 %v619
  %vm626 = vweird.f32 %v620
  %vm627 = vmor %vm625, %vm626
  %v628 = vsel %vm627, %v620, %v624
  %v629 = vand.u32 2147483647, %v619
  %vm630 = vcmp.eq.f32.partialorder %v629, 8.507059e+37
  %v631 = vand.u32 %v619, 2147483648
  %v632 = vor.u32 1.1754944e-38, %v631
  %v633 = vsel %vm630, %v632, %v628
  %v634 = vmul.f32 1.0, %v633
  %v635 = vmul.f32 %v614, %v498
  %v636 = vmul.f32 %v595, %v615
  %v637 = vadd.f32 %v635, %v636
  %v638 = vtanh.pop %v637
  %v639 = vmul.f32 %v634, %v638
  %s640 = scalar_lea.vmem %s3, 8
  %641 = vst [vmem:[%s640] sm:$0xf] %v639
  %s642 = scalar_lea.vmem %s0, 24
  %v643 = vld [vmem:[%s642] sm:$0xff]
  %v644 = vpack.c.bf16 %v639, %v639
  %v645 = vunpack.c.l.bf16 %v643
  %v646 = vunpack.c.h.bf16 %v643
  %649 = vst [vmem:[#allocation1] ss:$2 sm:$0xff] %v645
  %s650 = scalar_lea.vmem [#allocation1], 16
  %651 = vst [vmem:[%s650] ss:$2 sm:$0xff] %v646
  %v652 = vld.sshfl [vmem:[#allocation1] sm:$0xff pattern:$0x75316420]
  %v653 = vld.sshfl [vmem:[#allocation1 + $0x8] sm:$0xff pattern:$0x75316420]
  %v654 = vld.sshfl [vmem:[#allocation1 + $0x10] sm:$0xff pattern:$0x75316420]
  %v655 = vld.sshfl [vmem:[#allocation1 + $0x18] sm:$0xff pattern:$0x75316420]
  %660 = vmatpush.bf16.msra.mxu0 %v186
  %661 = vmatpush.bf16.msra.mxu0 %v182
  %662 = vmatpush.bf16.msra.mxu0 %v178
  %663 = vmatpush.bf16.msra.mxu0 %v174
  %664 = vmatpush.bf16.msra.mxu0 %v170
  %665 = vmatpush.bf16.msra.mxu0 %v166
  %666 = vmatpush.bf16.msra.mxu0 %v162
  %667 = vmatpush.bf16.msra.mxu0 %v158
  %668 = vmatmul.bf16.gmra.mxu0 %v644
  %v669 = vpop.f32.mrf.mxu0
  %v670 = vadd.f32 %v652, %v669
  %v671 = vpop.f32.mrf.mxu0
  %672 = vdwg.mxu0
  %673 = vmatpush.bf16.msra.mxu0 %v187
  %674 = vmatpush.bf16.msra.mxu0 %v183
  %675 = vmatpush.bf16.msra.mxu0 %v179
  %676 = vmatpush.bf16.msra.mxu0 %v175
  %677 = vmatpush.bf16.msra.mxu0 %v171
  %678 = vmatpush.bf16.msra.mxu0 %v167
  %679 = vmatpush.bf16.msra.mxu0 %v163
  %680 = vmatpush.bf16.msra.mxu0 %v159
  %681 = vmatmul.bf16.gmra.mxu0 %v644
  %v682 = vpop.f32.mrf.mxu0
  %v683 = vadd.f32 %v653, %v682
  %v684 = vpop.f32.mrf.mxu0
  %685 = vdwg.mxu0
  %686 = vmatpush.bf16.msra.mxu0 %v188
  %687 = vmatpush.bf16.msra.mxu0 %v184
  %688 = vmatpush.bf16.msra.mxu0 %v180
  %689 = vmatpush.bf16.msra.mxu0 %v176
  %690 = vmatpush.bf16.msra.mxu0 %v172
  %691 = vmatpush.bf16.msra.mxu0 %v168
  %692 = vmatpush.bf16.msra.mxu0 %v164
  %693 = vmatpush.bf16.msra.mxu0 %v160
  %694 = vmatmul.bf16.gmra.mxu0 %v644
  %v695 = vpop.f32.mrf.mxu0
  %v696 = vadd.f32 %v654, %v695
  %v697 = vpop.f32.mrf.mxu0
  %698 = vdwg.mxu0
  %699 = vmatpush.bf16.msra.mxu0 %v189
  %700 = vmatpush.bf16.msra.mxu0 %v185
  %701 = vmatpush.bf16.msra.mxu0 %v181
  %702 = vmatpush.bf16.msra.mxu0 %v177
  %703 = vmatpush.bf16.msra.mxu0 %v173
  %704 = vmatpush.bf16.msra.mxu0 %v169
  %705 = vmatpush.bf16.msra.mxu0 %v165
  %706 = vmatpush.bf16.msra.mxu0 %v161
  %707 = vmatmul.bf16.gmra.mxu0 %v644
  %v708 = vpop.f32.mrf.mxu0
  %v709 = vadd.f32 %v655, %v708
  %v710 = vpop.f32.mrf.mxu0
  %711 = vdwg.mxu0
  %v712 = vadd.f32 %v670, %v288
  %v713 = vadd.f32 %v683, %v289
  %v714 = vadd.f32 %v696, %v290
  %v715 = vadd.f32 %v709, %v291
  %v716 = vxor.u32 %v712, 2147483648
  %v717 = vmul.f32 %v716, 1.442695
  %v718 = vpow.pop %v717
  %v719 = vadd.f32 %v718, 1.0
  %v720 = vrcp.pop %v719
  %v721 = vmul.f32 %v719, %v720
  %v722 = vsub.f32 1.0, %v721
  %v723 = vmul.f32 %v720, %v722
  %v724 = vadd.f32 %v720, %v723
  %vm725 = vweird.f32 %v719
  %vm726 = vweird.f32 %v720
  %vm727 = vmor %vm725, %vm726
  %v728 = vsel %vm727, %v720, %v724
  %v729 = vand.u32 2147483647, %v719
  %vm730 = vcmp.eq.f32.partialorder %v729, 8.507059e+37
  %v731 = vand.u32 %v719, 2147483648
  %v732 = vor.u32 1.1754944e-38, %v731
  %v733 = vsel %vm730, %v732, %v728
  %v734 = vmul.f32 1.0, %v733
  %v735 = vxor.u32 %v713, 2147483648
  %v736 = vmul.f32 %v735, 1.442695
  %v737 = vpow.pop %v736
  %v738 = vadd.f32 %v737, 1.0
  %v739 = vrcp.pop %v738
  %v740 = vmul.f32 %v738, %v739
  %v741 = vsub.f32 1.0, %v740
  %v742 = vmul.f32 %v739, %v741
  %v743 = vadd.f32 %v739, %v742
  %vm744 = vweird.f32 %v738
  %vm745 = vweird.f32 %v739
  %vm746 = vmor %vm744, %vm745
  %v747 = vsel %vm746, %v739, %v743
  %v748 = vand.u32 2147483647, %v738
  %vm749 = vcmp.eq.f32.partialorder %v748, 8.507059e+37
  %v750 = vand.u32 %v738, 2147483648
  %v751 = vor.u32 1.1754944e-38, %v750
  %v752 = vsel %vm749, %v751, %v747
  %v753 = vmul.f32 1.0, %v752
  %v754 = vtanh.pop %v714
  %v755 = vxor.u32 %v715, 2147483648
  %v756 = vmul.f32 %v755, 1.442695
  %v757 = vpow.pop %v756
  %v758 = vadd.f32 %v757, 1.0
  %v759 = vrcp.pop %v758
  %v760 = vmul.f32 %v758, %v759
  %v761 = vsub.f32 1.0, %v760
  %v762 = vmul.f32 %v759, %v761
  %v763 = vadd.f32 %v759, %v762
  %vm764 = vweird.f32 %v758
  %vm765 = vweird.f32 %v759
  %vm766 = vmor %vm764, %vm765
  %v767 = vsel %vm766, %v759, %v763
  %v768 = vand.u32 2147483647, %v758
  %vm769 = vcmp.eq.f32.partialorder %v768, 8.507059e+37
  %v770 = vand.u32 %v758, 2147483648
  %v771 = vor.u32 1.1754944e-38, %v770
  %v772 = vsel %vm769, %v771, %v767
  %v773 = vmul.f32 1.0, %v772
  %v774 = vmul.f32 %v753, %v637
  %v775 = vmul.f32 %v734, %v754
  %v776 = vadd.f32 %v774, %v775
  %v777 = vtanh.pop %v776
  %v778 = vmul.f32 %v773, %v777
  %s779 = scalar_lea.vmem %s3, 12
  %780 = vst [vmem:[%s779] sm:$0xf] %v778
  %s781 = scalar_lea.vmem %s0, 32
  %v782 = vld [vmem:[%s781] sm:$0xff]
  %v783 = vpack.c.bf16 %v778, %v778
  %v784 = vunpack.c.l.bf16 %v782
  %v785 = vunpack.c.h.bf16 %v782
  %788 = vst [vmem:[#allocation1] ss:$2 sm:$0xff] %v784
  %s789 = scalar_lea.vmem [#allocation1], 16
  %790 = vst [vmem:[%s789] ss:$2 sm:$0xff] %v785
  %v791 = vld.sshfl [vmem:[#allocation1] sm:$0xff pattern:$0x75316420]
  %v792 = vld.sshfl [vmem:[#allocation1 + $0x8] sm:$0xff pattern:$0x75316420]
  %v793 = vld.sshfl [vmem:[#allocation1 + $0x10] sm:$0xff pattern:$0x75316420]
  %v794 = vld.sshfl [vmem:[#allocation1 + $0x18] sm:$0xff pattern:$0x75316420]
  %799 = vmatpush.bf16.msra.mxu0 %v186
  %800 = vmatpush.bf16.msra.mxu0 %v182
  %801 = vmatpush.bf16.msra.mxu0 %v178
  %802 = vmatpush.bf16.msra.mxu0 %v174
  %803 = vmatpush.bf16.msra.mxu0 %v170
  %804 = vmatpush.bf16.msra.mxu0 %v166
  %805 = vmatpush.bf16.msra.mxu0 %v162
  %806 = vmatpush.bf16.msra.mxu0 %v158
  %807 = vmatmul.bf16.gmra.mxu0 %v783
  %v808 = vpop.f32.mrf.mxu0
  %v809 = vadd.f32 %v791, %v808
  %v810 = vpop.f32.mrf.mxu0
  %811 = vdwg.mxu0
  %812 = vmatpush.bf16.msra.mxu0 %v187
  %813 = vmatpush.bf16.msra.mxu0 %v183
  %814 = vmatpush.bf16.msra.mxu0 %v179
  %815 = vmatpush.bf16.msra.mxu0 %v175
  %816 = vmatpush.bf16.msra.mxu0 %v171
  %817 = vmatpush.bf16.msra.mxu0 %v167
  %818 = vmatpush.bf16.msra.mxu0 %v163
  %819 = vmatpush.bf16.msra.mxu0 %v159
  %820 = vmatmul.bf16.gmra.mxu0 %v783
  %v821 = vpop.f32.mrf.mxu0
  %v822 = vadd.f32 %v792, %v821
  %v823 = vpop.f32.mrf.mxu0
  %824 = vdwg.mxu0
  %825 = vmatpush.bf16.msra.mxu0 %v188
  %826 = vmatpush.bf16.msra.mxu0 %v184
  %827 = vmatpush.bf16.msra.mxu0 %v180
  %828 = vmatpush.bf16.msra.mxu0 %v176
  %829 = vmatpush.bf16.msra.mxu0 %v172
  %830 = vmatpush.bf16.msra.mxu0 %v168
  %831 = vmatpush.bf16.msra.mxu0 %v164
  %832 = vmatpush.bf16.msra.mxu0 %v160
  %833 = vmatmul.bf16.gmra.mxu0 %v783
  %v834 = vpop.f32.mrf.mxu0
  %v835 = vadd.f32 %v793, %v834
  %v836 = vpop.f32.mrf.mxu0
  %837 = vdwg.mxu0
  %838 = vmatpush.bf16.msra.mxu0 %v189
  %839 = vmatpush.bf16.msra.mxu0 %v185
  %840 = vmatpush.bf16.msra.mxu0 %v181
  %841 = vmatpush.bf16.msra.mxu0 %v177
  %842 = vmatpush.bf16.msra.mxu0 %v173
  %843 = vmatpush.bf16.msra.mxu0 %v169
  %844 = vmatpush.bf16.msra.mxu0 %v165
  %845 = vmatpush.bf16.msra.mxu0 %v161
  %846 = vmatmul.bf16.gmra.mxu0 %v783
  %v847 = vpop.f32.mrf.mxu0
  %v848 = vadd.f32 %v794, %v847
  %v849 = vpop.f32.mrf.mxu0
  %850 = vdwg.mxu0
  %v851 = vadd.f32 %v809, %v288
  %v852 = vadd.f32 %v822, %v289
  %v853 = vadd.f32 %v835, %v290
  %v854 = vadd.f32 %v848, %v291
  %v855 = vxor.u32 %v851, 2147483648
  %v856 = vmul.f32 %v855, 1.442695
  %v857 = vpow.pop %v856
  %v858 = vadd.f32 %v857, 1.0
  %v859 = vrcp.pop %v858
  %v860 = vmul.f32 %v858, %v859
  %v861 = vsub.f32 1.0, %v860
  %v862 = vmul.f32 %v859, %v861
  %v863 = vadd.f32 %v859, %v862
  %vm864 = vweird.f32 %v858
  %vm865 = vweird.f32 %v859
  %vm866 = vmor %vm864, %vm865
  %v867 = vsel %vm866, %v859, %v863
  %v868 = vand.u32 2147483647, %v858
  %vm869 = vcmp.eq.f32.partialorder %v868, 8.507059e+37
  %v870 = vand.u32 %v858, 2147483648
  %v871 = vor.u32 1.1754944e-38, %v870
  %v872 = vsel %vm869, %v871, %v867
  %v873 = vmul.f32 1.0, %v872
  %v874 = vxor.u32 %v852, 2147483648
  %v875 = vmul.f32 %v874, 1.442695
  %v876 = vpow.pop %v875
  %v877 = vadd.f32 %v876, 1.0
  %v878 = vrcp.pop %v877
  %v879 = vmul.f32 %v877, %v878
  %v880 = vsub.f32 1.0, %v879
  %v881 = vmul.f32 %v878, %v880
  %v882 = vadd.f32 %v878, %v881
  %vm883 = vweird.f32 %v877
  %vm884 = vweird.f32 %v878
  %vm885 = vmor %vm883, %vm884
  %v886 = vsel %vm885, %v878, %v882
  %v887 = vand.u32 2147483647, %v877
  %vm888 = vcmp.eq.f32.partialorder %v887, 8.507059e+37
  %v889 = vand.u32 %v877, 2147483648
  %v890 = vor.u32 1.1754944e-38, %v889
  %v891 = vsel %vm888, %v890, %v886
  %v892 = vmul.f32 1.0, %v891
  %v893 = vtanh.pop %v853
  %v894 = vxor.u32 %v854, 2147483648
  %v895 = vmul.f32 %v894, 1.442695
  %v896 = vpow.pop %v895
  %v897 = vadd.f32 %v896, 1.0
  %v898 = vrcp.pop %v897
  %v899 = vmul.f32 %v897, %v898
  %v900 = vsub.f32 1.0, %v899
  %v901 = vmul.f32 %v898, %v900
  %v902 = vadd.f32 %v898, %v901
  %vm903 = vweird.f32 %v897
  %vm904 = vweird.f32 %v898
  %vm905 = vmor %vm903, %vm904
  %v906 = vsel %vm905, %v898, %v902
  %v907 = vand.u32 2147483647, %v897
  %vm908 = vcmp.eq.f32.partialorder %v907, 8.507059e+37
  %v909 = vand.u32 %v897, 2147483648
  %v910 = vor.u32 1.1754944e-38, %v909
  %v911 = vsel %vm908, %v910, %v906
  %v912 = vmul.f32 1.0, %v911
  %v913 = vmul.f32 %v892, %v776
  %v914 = vmul.f32 %v873, %v893
  %v915 = vadd.f32 %v913, %v914
  %v916 = vtanh.pop %v915
  %v917 = vmul.f32 %v912, %v916
  %s918 = scalar_lea.vmem %s3, 16
  %919 = vst [vmem:[%s918] sm:$0xf] %v917
  %s920 = scalar_lea.vmem %s0, 40
  %v921 = vld [vmem:[%s920] sm:$0xff]
  %v922 = vpack.c.bf16 %v917, %v917
  %v923 = vunpack.c.l.bf16 %v921
  %v924 = vunpack.c.h.bf16 %v921
  %927 = vst [vmem:[#allocation1] ss:$2 sm:$0xff] %v923
  %s928 = scalar_lea.vmem [#allocation1], 16
  %929 = vst [vmem:[%s928] ss:$2 sm:$0xff] %v924
  %v930 = vld.sshfl [vmem:[#allocation1] sm:$0xff pattern:$0x75316420]
  %v931 = vld.sshfl [vmem:[#allocation1 + $0x8] sm:$0xff pattern:$0x75316420]
  %v932 = vld.sshfl [vmem:[#allocation1 + $0x10] sm:$0xff pattern:$0x75316420]
  %v933 = vld.sshfl [vmem:[#allocation1 + $0x18] sm:$0xff pattern:$0x75316420]
  %938 = vmatpush.bf16.msra.mxu0 %v186
  %939 = vmatpush.bf16.msra.mxu0 %v182
  %940 = vmatpush.bf16.msra.mxu0 %v178
  %941 = vmatpush.bf16.msra.mxu0 %v174
  %942 = vmatpush.bf16.msra.mxu0 %v170
  %943 = vmatpush.bf16.msra.mxu0 %v166
  %944 = vmatpush.bf16.msra.mxu0 %v162
  %945 = vmatpush.bf16.msra.mxu0 %v158
  %946 = vmatmul.bf16.gmra.mxu0 %v922
  %v947 = vpop.f32.mrf.mxu0
  %v948 = vadd.f32 %v930, %v947
  %v949 = vpop.f32.mrf.mxu0
  %950 = vdwg.mxu0
  %951 = vmatpush.bf16.msra.mxu0 %v187
  %952 = vmatpush.bf16.msra.mxu0 %v183
  %953 = vmatpush.bf16.msra.mxu0 %v179
  %954 = vmatpush.bf16.msra.mxu0 %v175
  %955 = vmatpush.bf16.msra.mxu0 %v171
  %956 = vmatpush.bf16.msra.mxu0 %v167
  %957 = vmatpush.bf16.msra.mxu0 %v163
  %958 = vmatpush.bf16.msra.mxu0 %v159
  %959 = vmatmul.bf16.gmra.mxu0 %v922
  %v960 = vpop.f32.mrf.mxu0
  %v961 = vadd.f32 %v931, %v960
  %v962 = vpop.f32.mrf.mxu0
  %963 = vdwg.mxu0
  %964 = vmatpush.bf16.msra.mxu0 %v188
  %965 = vmatpush.bf16.msra.mxu0 %v184
  %966 = vmatpush.bf16.msra.mxu0 %v180
  %967 = vmatpush.bf16.msra.mxu0 %v176
  %968 = vmatpush.bf16.msra.mxu0 %v172
  %969 = vmatpush.bf16.msra.mxu0 %v168
  %970 = vmatpush.bf16.msra.mxu0 %v164
  %971 = vmatpush.bf16.msra.mxu0 %v160
  %972 = vmatmul.bf16.gmra.mxu0 %v922
  %v973 = vpop.f32.mrf.mxu0
  %v974 = vadd.f32 %v932, %v973
  %v975 = vpop.f32.mrf.mxu0
  %976 = vdwg.mxu0
  %977 = vmatpush.bf16.msra.mxu0 %v189
  %978 = vmatpush.bf16.msra.mxu0 %v185
  %979 = vmatpush.bf16.msra.mxu0 %v181
  %980 = vmatpush.bf16.msra.mxu0 %v177
  %981 = vmatpush.bf16.msra.mxu0 %v173
  %982 = vmatpush.bf16.msra.mxu0 %v169
  %983 = vmatpush.bf16.msra.mxu0 %v165
  %984 = vmatpush.bf16.msra.mxu0 %v161
  %985 = vmatmul.bf16.gmra.mxu0 %v922
  %v986 = vpop.f32.mrf.mxu0
  %v987 = vadd.f32 %v933, %v986
  %v988 = vpop.f32.mrf.mxu0
  %989 = vdwg.mxu0
  %v990 = vadd.f32 %v948, %v288
  %v991 = vadd.f32 %v961, %v289
  %v992 = vadd.f32 %v974, %v290
  %v993 = vadd.f32 %v987, %v291
  %v994 = vxor.u32 %v990, 2147483648
  %v995 = vmul.f32 %v994, 1.442695
  %v996 = vpow.pop %v995
  %v997 = vadd.f32 %v996, 1.0
  %v998 = vrcp.pop %v997
  %v999 = vmul.f32 %v997, %v998
  %v1000 = vsub.f32 1.0, %v999
  %v1001 = vmul.f32 %v998, %v1000
  %v1002 = vadd.f32 %v998, %v1001
  %vm1003 = vweird.f32 %v997
  %vm1004 = vweird.f32 %v998
  %vm1005 = vmor %vm1003, %vm1004
  %v1006 = vsel %vm1005, %v998, %v1002
  %v1007 = vand.u32 2147483647, %v997
  %vm1008 = vcmp.eq.f32.partialorder %v1007, 8.507059e+37
  %v1009 = vand.u32 %v997, 2147483648
  %v1010 = vor.u32 1.1754944e-38, %v1009
  %v1011 = vsel %vm1008, %v1010, %v1006
  %v1012 = vmul.f32 1.0, %v1011
  %v1013 = vxor.u32 %v991, 2147483648
  %v1014 = vmul.f32 %v1013, 1.442695
  %v1015 = vpow.pop %v1014
  %v1016 = vadd.f32 %v1015, 1.0
  %v1017 = vrcp.pop %v1016
  %v1018 = vmul.f32 %v1016, %v1017
  %v1019 = vsub.f32 1.0, %v1018
  %v1020 = vmul.f32 %v1017, %v1019
  %v1021 = vadd.f32 %v1017, %v1020
  %vm1022 = vweird.f32 %v1016
  %vm1023 = vweird.f32 %v1017
  %vm1024 = vmor %vm1022, %vm1023
  %v1025 = vsel %vm1024, %v1017, %v1021
  %v1026 = vand.u32 2147483647, %v1016
  %vm1027 = vcmp.eq.f32.partialorder %v1026, 8.507059e+37
  %v1028 = vand.u32 %v1016, 2147483648
  %v1029 = vor.u32 1.1754944e-38, %v1028
  %v1030 = vsel %vm1027, %v1029, %v1025
  %v1031 = vmul.f32 1.0, %v1030
  %v1032 = vtanh.pop %v992
  %v1033 = vxor.u32 %v993, 2147483648
  %v1034 = vmul.f32 %v1033, 1.442695
  %v1035 = vpow.pop %v1034
  %v1036 = vadd.f32 %v1035, 1.0
  %v1037 = vrcp.pop %v1036
  %v1038 = vmul.f32 %v1036, %v1037
  %v1039 = vsub.f32 1.0, %v1038
  %v1040 = vmul.f32 %v1037, %v1039
  %v1041 = vadd.f32 %v1037, %v1040
  %vm1042 = vweird.f32 %v1036
  %vm1043 = vweird.f32 %v1037
  %vm1044 = vmor %vm1042, %vm1043
  %v1045 = vsel %vm1044, %v1037, %v1041
  %v1046 = vand.u32 2147483647, %v1036
  %vm1047 = vcmp.eq.f32.partialorder %v1046, 8.507059e+37
  %v1048 = vand.u32 %v1036, 2147483648
  %v1049 = vor.u32 1.1754944e-38, %v1048
  %v1050 = vsel %vm1047, %v1049, %v1045
  %v1051 = vmul.f32 1.0, %v1050
  %v1052 = vmul.f32 %v1031, %v915
  %v1053 = vmul.f32 %v1012, %v1032
  %v1054 = vadd.f32 %v1052, %v1053
  %v1055 = vtanh.pop %v1054
  %v1056 = vmul.f32 %v1051, %v1055
  %s1057 = scalar_lea.vmem %s3, 20
  %1058 = vst [vmem:[%s1057] sm:$0xf] %v1056
  %s1059 = scalar_lea.vmem %s0, 48
  %v1060 = vld [vmem:[%s1059] sm:$0xff]
  %v1061 = vpack.c.bf16 %v1056, %v1056
  %v1062 = vunpack.c.l.bf16 %v1060
  %v1063 = vunpack.c.h.bf16 %v1060
  %1066 = vst [vmem:[#allocation1] ss:$2 sm:$0xff] %v1062
  %s1067 = scalar_lea.vmem [#allocation1], 16
  %1068 = vst [vmem:[%s1067] ss:$2 sm:$0xff] %v1063
  %v1069 = vld.sshfl [vmem:[#allocation1] sm:$0xff pattern:$0x75316420]
  %v1070 = vld.sshfl [vmem:[#allocation1 + $0x8] sm:$0xff pattern:$0x75316420]
  %v1071 = vld.sshfl [vmem:[#allocation1 + $0x10] sm:$0xff pattern:$0x75316420]
  %v1072 = vld.sshfl [vmem:[#allocation1 + $0x18] sm:$0xff pattern:$0x75316420]
  %1077 = vmatpush.bf16.msra.mxu0 %v186
  %1078 = vmatpush.bf16.msra.mxu0 %v182
  %1079 = vmatpush.bf16.msra.mxu0 %v178
  %1080 = vmatpush.bf16.msra.mxu0 %v174
  %1081 = vmatpush.bf16.msra.mxu0 %v170
  %1082 = vmatpush.bf16.msra.mxu0 %v166
  %1083 = vmatpush.bf16.msra.mxu0 %v162
  %1084 = vmatpush.bf16.msra.mxu0 %v158
  %1085 = vmatmul.bf16.gmra.mxu0 %v1061
  %v1086 = vpop.f32.mrf.mxu0
  %v1087 = vadd.f32 %v1069, %v1086
  %v1088 = vpop.f32.mrf.mxu0
  %1089 = vdwg.mxu0
  %1090 = vmatpush.bf16.msra.mxu0 %v187
  %1091 = vmatpush.bf16.msra.mxu0 %v183
  %1092 = vmatpush.bf16.msra.mxu0 %v179
  %1093 = vmatpush.bf16.msra.mxu0 %v175
  %1094 = vmatpush.bf16.msra.mxu0 %v171
  %1095 = vmatpush.bf16.msra.mxu0 %v167
  %1096 = vmatpush.bf16.msra.mxu0 %v163
  %1097 = vmatpush.bf16.msra.mxu0 %v159
  %1098 = vmatmul.bf16.gmra.mxu0 %v1061
  %v1099 = vpop.f32.mrf.mxu0
  %v1100 = vadd.f32 %v1070, %v1099
  %v1101 = vpop.f32.mrf.mxu0
  %1102 = vdwg.mxu0
  %1103 = vmatpush.bf16.msra.mxu0 %v188
  %1104 = vmatpush.bf16.msra.mxu0 %v184
  %1105 = vmatpush.bf16.msra.mxu0 %v180
  %1106 = vmatpush.bf16.msra.mxu0 %v176
  %1107 = vmatpush.bf16.msra.mxu0 %v172
  %1108 = vmatpush.bf16.msra.mxu0 %v168
  %1109 = vmatpush.bf16.msra.mxu0 %v164
  %1110 = vmatpush.bf16.msra.mxu0 %v160
  %1111 = vmatmul.bf16.gmra.mxu0 %v1061
  %v1112 = vpop.f32.mrf.mxu0
  %v1113 = vadd.f32 %v1071, %v1112
  %v1114 = vpop.f32.mrf.mxu0
  %1115 = vdwg.mxu0
  %1116 = vmatpush.bf16.msra.mxu0 %v189
  %1117 = vmatpush.bf16.msra.mxu0 %v185
  %1118 = vmatpush.bf16.msra.mxu0 %v181
  %1119 = vmatpush.bf16.msra.mxu0 %v177
  %1120 = vmatpush.bf16.msra.mxu0 %v173
  %1121 = vmatpush.bf16.msra.mxu0 %v169
  %1122 = vmatpush.bf16.msra.mxu0 %v165
  %1123 = vmatpush.bf16.msra.mxu0 %v161
  %1124 = vmatmul.bf16.gmra.mxu0 %v1061
  %v1125 = vpop.f32.mrf.mxu0
  %v1126 = vadd.f32 %v1072, %v1125
  %v1127 = vpop.f32.mrf.mxu0
  %1128 = vdwg.mxu0
  %v1129 = vadd.f32 %v1087, %v288
  %v1130 = vadd.f32 %v1100, %v289
  %v1131 = vadd.f32 %v1113, %v290
  %v1132 = vadd.f32 %v1126, %v291
  %v1133 = vxor.u32 %v1129, 2147483648
  %v1134 = vmul.f32 %v1133, 1.442695
  %v1135 = vpow.pop %v1134
  %v1136 = vadd.f32 %v1135, 1.0
  %v1137 = vrcp.pop %v1136
  %v1138 = vmul.f32 %v1136, %v1137
  %v1139 = vsub.f32 1.0, %v1138
  %v1140 = vmul.f32 %v1137, %v1139
  %v1141 = vadd.f32 %v1137, %v1140
  %vm1142 = vweird.f32 %v1136
  %vm1143 = vweird.f32 %v1137
  %vm1144 = vmor %vm1142, %vm1143
  %v1145 = vsel %vm1144, %v1137, %v1141
  %v1146 = vand.u32 2147483647, %v1136
  %vm1147 = vcmp.eq.f32.partialorder %v1146, 8.507059e+37
  %v1148 = vand.u32 %v1136, 2147483648
  %v1149 = vor.u32 1.1754944e-38, %v1148
  %v1150 = vsel %vm1147, %v1149, %v1145
  %v1151 = vmul.f32 1.0, %v1150
  %v1152 = vxor.u32 %v1130, 2147483648
  %v1153 = vmul.f32 %v1152, 1.442695
  %v1154 = vpow.pop %v1153
  %v1155 = vadd.f32 %v1154, 1.0
  %v1156 = vrcp.pop %v1155
  %v1157 = vmul.f32 %v1155, %v1156
  %v1158 = vsub.f32 1.0, %v1157
  %v1159 = vmul.f32 %v1156, %v1158
  %v1160 = vadd.f32 %v1156, %v1159
  %vm1161 = vweird.f32 %v1155
  %vm1162 = vweird.f32 %v1156
  %vm1163 = vmor %vm1161, %vm1162
  %v1164 = vsel %vm1163, %v1156, %v1160
  %v1165 = vand.u32 2147483647, %v1155
  %vm1166 = vcmp.eq.f32.partialorder %v1165, 8.507059e+37
  %v1167 = vand.u32 %v1155, 2147483648
  %v1168 = vor.u32 1.1754944e-38, %v1167
  %v1169 = vsel %vm1166, %v1168, %v1164
  %v1170 = vmul.f32 1.0, %v1169
  %v1171 = vtanh.pop %v1131
  %v1172 = vxor.u32 %v1132, 2147483648
  %v1173 = vmul.f32 %v1172, 1.442695
  %v1174 = vpow.pop %v1173
  %v1175 = vadd.f32 %v1174, 1.0
  %v1176 = vrcp.pop %v1175
  %v1177 = vmul.f32 %v1175, %v1176
  %v1178 = vsub.f32 1.0, %v1177
  %v1179 = vmul.f32 %v1176, %v1178
  %v1180 = vadd.f32 %v1176, %v1179
  %vm1181 = vweird.f32 %v1175
  %vm1182 = vweird.f32 %v1176
  %vm1183 = vmor %vm1181, %vm1182
  %v1184 = vsel %vm1183, %v1176, %v1180
  %v1185 = vand.u32 2147483647, %v1175
  %vm1186 = vcmp.eq.f32.partialorder %v1185, 8.507059e+37
  %v1187 = vand.u32 %v1175, 2147483648
  %v1188 = vor.u32 1.1754944e-38, %v1187
  %v1189 = vsel %vm1186, %v1188, %v1184
  %v1190 = vmul.f32 1.0, %v1189
  %v1191 = vmul.f32 %v1170, %v1054
  %v1192 = vmul.f32 %v1151, %v1171
  %v1193 = vadd.f32 %v1191, %v1192
  %v1194 = vtanh.pop %v1193
  %v1195 = vmul.f32 %v1190, %v1194
  %s1196 = scalar_lea.vmem %s3, 24
  %1197 = vst [vmem:[%s1196] sm:$0xf] %v1195
  %s1198 = scalar_lea.vmem %s0, 56
  %v1199 = vld [vmem:[%s1198] sm:$0xff]
  %v1200 = vpack.c.bf16 %v1195, %v1195
  %v1201 = vunpack.c.l.bf16 %v1199
  %v1202 = vunpack.c.h.bf16 %v1199
  %1205 = vst [vmem:[#allocation1] ss:$2 sm:$0xff] %v1201
  %s1206 = scalar_lea.vmem [#allocation1], 16
  %1207 = vst [vmem:[%s1206] ss:$2 sm:$0xff] %v1202
  %v1208 = vld.sshfl [vmem:[#allocation1] sm:$0xff pattern:$0x75316420]
  %v1209 = vld.sshfl [vmem:[#allocation1 + $0x8] sm:$0xff pattern:$0x75316420]
  %v1210 = vld.sshfl [vmem:[#allocation1 + $0x10] sm:$0xff pattern:$0x75316420]
  %v1211 = vld.sshfl [vmem:[#allocation1 + $0x18] sm:$0xff pattern:$0x75316420]
  %1216 = vmatpush.bf16.msra.mxu0 %v186
  %1217 = vmatpush.bf16.msra.mxu0 %v182
  %1218 = vmatpush.bf16.msra.mxu0 %v178
  %1219 = vmatpush.bf16.msra.mxu0 %v174
  %1220 = vmatpush.bf16.msra.mxu0 %v170
  %1221 = vmatpush.bf16.msra.mxu0 %v166
  %1222 = vmatpush.bf16.msra.mxu0 %v162
  %1223 = vmatpush.bf16.msra.mxu0 %v158
  %1224 = vmatmul.bf16.gmra.mxu0 %v1200
  %v1225 = vpop.f32.mrf.mxu0
  %v1226 = vadd.f32 %v1208, %v1225
  %v1227 = vpop.f32.mrf.mxu0
  %1228 = vdwg.mxu0
  %1229 = vmatpush.bf16.msra.mxu0 %v187
  %1230 = vmatpush.bf16.msra.mxu0 %v183
  %1231 = vmatpush.bf16.msra.mxu0 %v179
  %1232 = vmatpush.bf16.msra.mxu0 %v175
  %1233 = vmatpush.bf16.msra.mxu0 %v171
  %1234 = vmatpush.bf16.msra.mxu0 %v167
  %1235 = vmatpush.bf16.msra.mxu0 %v163
  %1236 = vmatpush.bf16.msra.mxu0 %v159
  %1237 = vmatmul.bf16.gmra.mxu0 %v1200
  %v1238 = vpop.f32.mrf.mxu0
  %v1239 = vadd.f32 %v1209, %v1238
  %v1240 = vpop.f32.mrf.mxu0
  %1241 = vdwg.mxu0
  %1242 = vmatpush.bf16.msra.mxu0 %v188
  %1243 = vmatpush.bf16.msra.mxu0 %v184
  %1244 = vmatpush.bf16.msra.mxu0 %v180
  %1245 = vmatpush.bf16.msra.mxu0 %v176
  %1246 = vmatpush.bf16.msra.mxu0 %v172
  %1247 = vmatpush.bf16.msra.mxu0 %v168
  %1248 = vmatpush.bf16.msra.mxu0 %v164
  %1249 = vmatpush.bf16.msra.mxu0 %v160
  %1250 = vmatmul.bf16.gmra.mxu0 %v1200
  %v1251 = vpop.f32.mrf.mxu0
  %v1252 = vadd.f32 %v1210, %v1251
  %v1253 = vpop.f32.mrf.mxu0
  %1254 = vdwg.mxu0
  %1255 = vmatpush.bf16.msra.mxu0 %v189
  %1256 = vmatpush.bf16.msra.mxu0 %v185
  %1257 = vmatpush.bf16.msra.mxu0 %v181
  %1258 = vmatpush.bf16.msra.mxu0 %v177
  %1259 = vmatpush.bf16.msra.mxu0 %v173
  %1260 = vmatpush.bf16.msra.mxu0 %v169
  %1261 = vmatpush.bf16.msra.mxu0 %v165
  %1262 = vmatpush.bf16.msra.mxu0 %v161
  %1263 = vmatmul.bf16.gmra.mxu0 %v1200
  %v1264 = vpop.f32.mrf.mxu0
  %v1265 = vadd.f32 %v1211, %v1264
  %v1266 = vpop.f32.mrf.mxu0
  %1267 = vdwg.mxu0
  %v1268 = vadd.f32 %v1226, %v288
  %v1269 = vadd.f32 %v1239, %v289
  %v1270 = vadd.f32 %v1252, %v290
  %v1271 = vadd.f32 %v1265, %v291
  %v1272 = vxor.u32 %v1268, 2147483648
  %v1273 = vmul.f32 %v1272, 1.442695
  %v1274 = vpow.pop %v1273
  %v1275 = vadd.f32 %v1274, 1.0
  %v1276 = vrcp.pop %v1275
  %v1277 = vmul.f32 %v1275, %v1276
  %v1278 = vsub.f32 1.0, %v1277
  %v1279 = vmul.f32 %v1276, %v1278
  %v1280 = vadd.f32 %v1276, %v1279
  %vm1281 = vweird.f32 %v1275
  %vm1282 = vweird.f32 %v1276
  %vm1283 = vmor %vm1281, %vm1282
  %v1284 = vsel %vm1283, %v1276, %v1280
  %v1285 = vand.u32 2147483647, %v1275
  %vm1286 = vcmp.eq.f32.partialorder %v1285, 8.507059e+37
  %v1287 = vand.u32 %v1275, 2147483648
  %v1288 = vor.u32 1.1754944e-38, %v1287
  %v1289 = vsel %vm1286, %v1288, %v1284
  %v1290 = vmul.f32 1.0, %v1289
  %v1291 = vxor.u32 %v1269, 2147483648
  %v1292 = vmul.f32 %v1291, 1.442695
  %v1293 = vpow.pop %v1292
  %v1294 = vadd.f32 %v1293, 1.0
  %v1295 = vrcp.pop %v1294
  %v1296 = vmul.f32 %v1294, %v1295
  %v1297 = vsub.f32 1.0, %v1296
  %v1298 = vmul.f32 %v1295, %v1297
  %v1299 = vadd.f32 %v1295, %v1298
  %vm1300 = vweird.f32 %v1294
  %vm1301 = vweird.f32 %v1295
  %vm1302 = vmor %vm1300, %vm1301
  %v1303 = vsel %vm1302, %v1295, %v1299
  %v1304 = vand.u32 2147483647, %v1294
  %vm1305 = vcmp.eq.f32.partialorder %v1304, 8.507059e+37
  %v1306 = vand.u32 %v1294, 2147483648
  %v1307 = vor.u32 1.1754944e-38, %v1306
  %v1308 = vsel %vm1305, %v1307, %v1303
  %v1309 = vmul.f32 1.0, %v1308
  %v1310 = vtanh.pop %v1270
  %v1311 = vxor.u32 %v1271, 2147483648
  %v1312 = vmul.f32 %v1311, 1.442695
  %v1313 = vpow.pop %v1312
  %v1314 = vadd.f32 %v1313, 1.0
  %v1315 = vrcp.pop %v1314
  %v1316 = vmul.f32 %v1314, %v1315
  %v1317 = vsub.f32 1.0, %v1316
  %v1318 = vmul.f32 %v1315, %v1317
  %v1319 = vadd.f32 %v1315, %v1318
  %vm1320 = vweird.f32 %v1314
  %vm1321 = vweird.f32 %v1315
  %vm1322 = vmor %vm1320, %vm1321
  %v1323 = vsel %vm1322, %v1315, %v1319
  %v1324 = vand.u32 2147483647, %v1314
  %vm1325 = vcmp.eq.f32.partialorder %v1324, 8.507059e+37
  %v1326 = vand.u32 %v1314, 2147483648
  %v1327 = vor.u32 1.1754944e-38, %v1326
  %v1328 = vsel %vm1325, %v1327, %v1323
  %v1329 = vmul.f32 1.0, %v1328
  %v1330 = vmul.f32 %v1309, %v1193
  %v1331 = vmul.f32 %v1290, %v1310
  %v1332 = vadd.f32 %v1330, %v1331
  %v1333 = vtanh.pop %v1332
  %v1334 = vmul.f32 %v1329, %v1333
  %s1335 = scalar_lea.vmem %s3, 28
  %1336 = vst [vmem:[%s1335] sm:$0xf] %v1334
  %1337 = vst [vmem:[#allocation2] sm:$0xf] %v1334
  %1338 = vst [vmem:[#allocation3] sm:$0xf] %v1332
  // Predicated region
  $region18: #{lstm_layer_forward.1} parent=0 // pred_check
    %p1339 = pneg %p17
  $region19: #{lstm_layer_forward.1} parent=0 // pred_check_branch
    %1341 = sbr.rel (%p1339) target = $region21
  $region20: #{lstm_layer_forward.1} parent=0 // pred_region
    %v1342 = vld [vmem:[#allocation2] sm:$0xf]
    %1343 = vst [vmem:[%s4] sm:$0xf] %v1342
    %v1344 = vld [vmem:[#allocation3] sm:$0xf]
    %1345 = vst [vmem:[%s5] sm:$0xf] %v1344
  $region21: #{lstm_layer_forward.1} parent=0 // pred_fallthru
    _
  // Predicated region
  $region22: #{lstm_layer_forward.1} parent=0 // pred_check
    _
  $region23: #{lstm_layer_forward.1} parent=0 // pred_check_branch
    %1347 = sbr.rel (0) target = $region25
  $region24: #{lstm_layer_forward.1} parent=0 // pred_region
    _
  $region25: #{lstm_layer_forward.1} parent=0 // pred_fallthru
    _
  // Predicated region
  $region26: #{lstm_layer_forward.1} parent=0 // pred_check
    _
  $region27: #{lstm_layer_forward.1} parent=0 // pred_check_branch
    %1349 = sbr.rel (0) target = $region29
  $region28: #{lstm_layer_forward.1} parent=0 // pred_region
    _
  $region29: #{lstm_layer_forward.1} parent=0 // pred_fallthru
    _
  // Predicated region
  $region30: #{lstm_layer_forward.1} parent=0 // pred_check
    _
  $region31: #{lstm_layer_forward.1} parent=0 // pred_check_branch
    %1351 = sbr.rel (0) target = $region33
  $region32: #{lstm_layer_forward.1} parent=0 // pred_region
    _
  $region33: #{lstm_layer_forward.1} parent=0 // pred_fallthru
    _
  // Predicated region
  $region34: #{lstm_layer_forward.1} parent=0 // pred_check
    _
  $region35: #{lstm_layer_forward.1} parent=0 // pred_check_branch
    %1353 = sbr.rel (0) target = $region37
  $region36: #{lstm_layer_forward.1} parent=0 // pred_region
    _
  $region37: #{lstm_layer_forward.1} parent=0 // pred_fallthru
    _
  // Predicated region
  $region38: #{lstm_layer_forward.1} parent=0 // pred_check
    _
  $region39: #{lstm_layer_forward.1} parent=0 // pred_check_branch
    %1355 = sbr.rel (0) target = $region41
  $region40: #{lstm_layer_forward.1} parent=0 // pred_region
    _
  $region41: #{lstm_layer_forward.1} parent=0 // pred_fallthru
    _
  // Predicated region
  $region42: #{lstm_layer_forward.1} parent=0 // pred_check
    _
  $region43: #{lstm_layer_forward.1} parent=0 // pred_check_branch
    %1357 = sbr.rel (0) target = $region45
  $region44: #{lstm_layer_forward.1} parent=0 // pred_region
    _
  $region45: #{lstm_layer_forward.1} parent=0 // pred_fallthru
    _

</llo_original>
